<compile_context>
chip_gen: v5e
topology: v5e:2x2
jax: 0.10.0
libtpu: 0.0.40
codegen_flags: <defaults>
</compile_context>

<pallas_src>
import functools

import jax
import jax.numpy as jnp
from jax.experimental import pallas as pl
from jax.experimental.pallas import tpu as pltpu


def _round_up(a, b):
    return ((a + b - 1) // b) * b


def gated_attention_kernel(x_ref, wab_ref, wc_ref,                  # inputs
                           araw_ref, m_ref, l_ref, acc_ref,         # outputs
                           m_sc, l_sc, acc_sc,                      # VMEM scratch
                           *, n_valid, d, tiles_per_core):
    """One (tn, L) tile: fused gate matmul, lane-dense scores, online-softmax
    pooled accumulation. Grid = (core_split, tile-within-split)."""
    c = pl.program_id(0)            # core-split index ("parallel"; 2 TCs on v7x)
    i = pl.program_id(1)            # tile index within this split ("arbitrary")
    tn = x_ref.shape[0]
    g = c * tiles_per_core + i      # UNCLAMPED global tile index -> drives validity masks

    @pl.when(i == 0)
    def _init():
        m_sc[...] = jnp.full_like(m_sc, -jnp.inf)
        l_sc[...] = jnp.zeros_like(l_sc)
        acc_sc[...] = jnp.zeros_like(acc_sc)

    # Zero rows past N: the partial last tile (and fully-dummy clamped tiles)
    # contain undefined data; 0 * NaN would poison the pooled matmul otherwise.
    row = jax.lax.broadcasted_iota(jnp.int32, (tn, 1), 0)
    x_f = jnp.where(g * tn + row < n_valid, x_ref[...], 0.0)          # (tn, L) f32
    x_bf = x_f.astype(jnp.bfloat16)                                   # in-kernel cast (VPU, hidden)

    # Fused gate: one (tn, L) @ (L, 2D) bf16 MXU matmul, f32 accumulation.
    ab = jnp.dot(x_bf, wab_ref[...], preferred_element_type=jnp.float32)
    a = jnp.maximum(ab[:, :d], 0.0)                                   # attention_a (ReLU)
    b = jax.nn.sigmoid(ab[:, d:])                                     # attention_b (sigmoid)
    gate = (a * b).astype(jnp.bfloat16)                               # (tn, D)

    # attention_c scores, lane-dense: contract D of (1, D) with D of (tn, D) -> (1, tn).
    scores = jax.lax.dot_general(
        wc_ref[...], gate,
        dimension_numbers=(((1,), (1,)), ((), ())),
        preferred_element_type=jnp.float32)                           # (1, tn) f32

    col = jax.lax.broadcasted_iota(jnp.int32, scores.shape, 1)
    scores = jnp.where(g * tn + col < n_valid, scores, -jnp.inf)
    araw_ref[...] = scores                                            # full-lane tile store

    # Online-softmax state update + MXU pooling of this tile.
    m_prev = m_sc[...]                                                # (1, 1)
    m_new = jnp.maximum(m_prev, jnp.max(scores, axis=-1, keepdims=True))
    # Fully-masked tiles (dummy tiles of an idle core split) keep m == -inf;
    # use a finite subtrahend so exp never sees (-inf) - (-inf) = NaN.
    m_safe = jnp.where(m_new == -jnp.inf, 0.0, m_new)
    alpha = jnp.exp(m_prev - m_safe)                                  # (1, 1)
    p = jnp.exp(scores - m_safe)                                      # (1, tn)
    l_sc[...] = alpha * l_sc[...] + jnp.sum(p, axis=-1, keepdims=True)
    pooled = jnp.dot(p.astype(jnp.bfloat16), x_bf,
                     preferred_element_type=jnp.float32)              # (1, L) on the MXU
    acc_sc[...] = alpha * acc_sc[...] + pooled
    m_sc[...] = m_new

    @pl.when(i == pl.num_programs(1) - 1)
    def _finalize():
        m_ref[...] = m_sc[...].reshape(m_ref.shape)
        l_ref[...] = l_sc[...].reshape(l_ref.shape)
        acc_ref[...] = acc_sc[...].reshape(acc_ref.shape)


def attention_gated_pallas(x, wab, wc, no_norm=False, tile_n=1024, core_splits=2):
    """x: (N, L) f32. wab: (L, 2D) fused [attention_a | attention_b] weights
    (pre-transposed). wc: (1, D) attention_c weight.
    Returns (x_out (1, L) f32, A (1, N) f32)."""
    N, L = x.shape
    two_d = wab.shape[1]
    d = two_d // 2
    assert N >= 1
    assert d % 128 == 0, "attention dim D must be a 128 multiple (lane-aligned gate split)"

    # 128-aligned tiles: unmasked score stores, legal bf16 sublane packing, MXU-filling M.
    tile_n = max(128, _round_up(tile_n, 128))
    tn = min(tile_n, _round_up(N, 128))
    n_tiles = pl.cdiv(N, tn)
    last_tile = n_tiles - 1

    C = max(1, int(core_splits))             # leading "parallel" axis (2 TensorCores on v7x)
    tpc = pl.cdiv(n_tiles, C)                # tiles per core split
    padded_cols = C * tpc * tn               # scores slab incl. dummy-tile columns

    # Weights are tiny; bf16 in the wrapper. x stays f32 and is cast in-kernel.
    wab_bf = wab.astype(jnp.bfloat16)
    wc_bf = wc.astype(jnp.bfloat16)

    kernel = functools.partial(gated_attention_kernel,
                               n_valid=N, d=d, tiles_per_core=tpc)

    a_raw, m_part, l_part, acc_part = pl.pallas_call(
        kernel,
        out_shape=(
            jax.ShapeDtypeStruct((1, padded_cols), jnp.float32),   # raw scores (lane-dense)
            jax.ShapeDtypeStruct((C, 1, 1), jnp.float32),          # per-split running max
            jax.ShapeDtypeStruct((C, 1, 1), jnp.float32),          # per-split exp-sum
            jax.ShapeDtypeStruct((C, 1, L), jnp.float32),          # per-split pooled numerator
        ),
        grid_spec=pltpu.PrefetchScalarGridSpec(
            num_scalar_prefetch=0,
            grid=(C, tpc),
            in_specs=[
                # Stream f32 x tiles; clamp dummy tiles onto the last real tile
                # (their contribution is fully masked in-kernel).
                pl.BlockSpec((tn, L),
                             lambda c, i: (jnp.minimum(c * tpc + i, last_tile), 0)),
                pl.BlockSpec((L, two_d), lambda c, i: (0, 0)),     # resident fused gate weights
                pl.BlockSpec((1, d), lambda c, i: (0, 0)),         # resident attention_c
            ],
            out_specs=[
                pl.BlockSpec((1, tn), lambda c, i: (0, c * tpc + i)),
                pl.BlockSpec((1, 1, 1), lambda c, i: (c, 0, 0)),
                pl.BlockSpec((1, 1, 1), lambda c, i: (c, 0, 0)),
                pl.BlockSpec((1, 1, L), lambda c, i: (c, 0, 0)),
            ],
            scratch_shapes=[
                pltpu.VMEM((1, 1), jnp.float32),                   # running max
                pltpu.VMEM((1, 1), jnp.float32),                   # running exp-sum
                pltpu.VMEM((1, L), jnp.float32),                   # rescaled pooled accumulator
            ],
        ),
        compiler_params=pltpu.CompilerParams(
            dimension_semantics=("parallel", "arbitrary"),
            vmem_limit_bytes=32 * 1024 * 1024,
        ),
    )(x, wab_bf, wc_bf)

    # Merge the per-core-split online-softmax partials (C*(L+2) floats; trivial).
    m_all = jnp.max(m_part, axis=0)                  # (1, 1)
    w = jnp.exp(m_part - m_all)                      # (C, 1, 1); -inf split -> weight 0
    den = jnp.sum(w * l_part, axis=0)                # (1, 1)
    num = jnp.sum(w * acc_part, axis=0)              # (1, L)
    x_out = num / den

    a_raw = a_raw[:, :N]                             # drop padded/dummy columns
    if no_norm:
        return x_out, a_raw
    return x_out, jnp.exp(a_raw - m_all) / den       # softmax from the computed stats


def _ref(x, wa, wb, wc, no_norm=False):
    """Pure-JAX f32 reference mirroring the PyTorch forward."""
    a = jnp.maximum(x @ wa, 0.0)
    b = jax.nn.sigmoid(x @ wb)
    A = (a * b) @ wc.T                               # (N, 1)
    A = A.T                                          # (1, N)
    A_ori = A
    A_sm = jax.nn.softmax(A, axis=-1)
    out = A_sm @ x                                   # (1, L)
    return (out, A_ori) if no_norm else (out, A_sm)


if __name__ == "__main__":
    # Shapes consistent with the module (L=input_dim=512, D=128, K=1).
    # N=300 exercises the ragged tail; tile_n=128 exercises multi-tile streaming
    # plus a fully-dummy tile on the second core split.
    N, L, D = 300, 512, 128

    key = jax.random.PRNGKey(0)
    kx, ka, kb, kc = jax.random.split(key, 4)

    x = jax.random.normal(kx, (N, L), dtype=jnp.float32)

    # nn.Linear-style init (uniform +/- 1/sqrt(fan_in)), stored pre-transposed (L, D).
    lim_L = 1.0 / jnp.sqrt(jnp.float32(L))
    lim_D = 1.0 / jnp.sqrt(jnp.float32(D))
    wa = jax.random.uniform(ka, (L, D), jnp.float32, -lim_L, lim_L)
    wb = jax.random.uniform(kb, (L, D), jnp.float32, -lim_L, lim_L)
    wc = jax.random.uniform(kc, (1, D), jnp.float32, -lim_D, lim_D)
    wab = jnp.concatenate([wa, wb], axis=1)          # fused (L, 2D)

    x_ref_out, A_ref = _ref(x, wa, wb, wc, no_norm=False)
    _, A_raw_ref = _ref(x, wa, wb, wc, no_norm=True)

    # Multi-tile path (3 real tiles, second core split gets 1 real + 1 dummy tile).
    x_out, A = attention_gated_pallas(x, wab, wc, no_norm=False, tile_n=128)
    jax.block_until_ready((x_out, A))
    assert x_out.shape == (1, L) and A.shape == (1, N)
    assert jnp.allclose(x_out, x_ref_out, atol=1e-2, rtol=1e-2)
    assert jnp.allclose(A, A_ref, atol=1e-3, rtol=1e-2)

    # Default large-tile path (single real tile; second core split fully dummy),
    # no_norm=True returns the raw pre-softmax scores.
    x_out2, A_raw = attention_gated_pallas(x, wab, wc, no_norm=True)
    jax.block_until_ready((x_out2, A_raw))
    assert A_raw.shape == (1, N)
    assert jnp.allclose(x_out2, x_ref_out, atol=1e-2, rtol=1e-2)
    assert jnp.allclose(A_raw, A_raw_ref, atol=1e-2, rtol=1e-2)

    print("KERNEL_OK")
</pallas_src>

<mosaic_0001>
module attributes {stable_mosaic.version = 11 : i64} {
  func.func @gated_attention_kernel(%arg0: i32, %arg1: i32, %arg2: memref<128x512xf32, #tpu.memory_space<vmem>>, %arg3: memref<512x256xbf16, #tpu.memory_space<vmem>>, %arg4: memref<1x128xbf16, #tpu.memory_space<vmem>>, %arg5: memref<1x128xf32, #tpu.memory_space<vmem>>, %arg6: memref<1x1x1xf32, #tpu.memory_space<vmem>>, %arg7: memref<1x1x1xf32, #tpu.memory_space<vmem>>, %arg8: memref<1x1x512xf32, #tpu.memory_space<vmem>>, %arg9: memref<1x1xf32, #tpu.memory_space<vmem>>, %arg10: memref<1x1xf32, #tpu.memory_space<vmem>>, %arg11: memref<1x512xf32, #tpu.memory_space<vmem>>) attributes {dimension_semantics = [#tpu.dimension_semantics<parallel>, #tpu.dimension_semantics<arbitrary>], iteration_bounds = array<i64: 2, 2>, scalar_prefetch = 0 : i64, scratch_operands = 3 : i64, tpu.core_type = #tpu.core_type<tc>, window_params = [{transform_indices = @transform_0, window_bounds = array<i64: 128, 512>}, {pipeline_mode = #tpu.pipeline_mode<synchronous>, transform_indices = @transform_1, window_bounds = array<i64: 512, 256>}, {pipeline_mode = #tpu.pipeline_mode<synchronous>, transform_indices = @transform_2, window_bounds = array<i64: 1, 128>}, {transform_indices = @transform_3, window_bounds = array<i64: 1, 128>}, {transform_indices = @transform_4, window_bounds = array<i64: 1, 1, 1>}, {transform_indices = @transform_5, window_bounds = array<i64: 1, 1, 1>}, {transform_indices = @transform_6, window_bounds = array<i64: 1, 1, 512>}]} {
    %c2_i32 = arith.constant 2 : i32
    %0 = arith.muli %arg0, %c2_i32 : i32
    %1 = arith.addi %0, %arg1 : i32
    %c0_i32 = arith.constant 0 : i32
    %2 = arith.cmpi eq, %arg1, %c0_i32 : i32
    %3 = arith.extui %2 : i1 to i32
    %c0_i32_0 = arith.constant 0 : i32
    %4 = arith.cmpi ne, %3, %c0_i32_0 : i32
    scf.if %4 {
      %cst_33 = arith.constant 0xFF800000 : f32
      %71 = vector.broadcast %cst_33 : f32 to vector<1x1xf32>
      %c0_34 = arith.constant 0 : index
      %c0_35 = arith.constant 0 : index
      %72 = vector.load %arg9[%c0_34, %c0_35] : memref<1x1xf32, #tpu.memory_space<vmem>>, vector<1x1xf32>
      tpu.vector_store %arg9[%c0_34, %c0_35], %71 {strides = array<i32>} : memref<1x1xf32, #tpu.memory_space<vmem>>, vector<1x1xf32>,
      %cst_36 = arith.constant 0.000000e+00 : f32
      %73 = vector.broadcast %cst_36 : f32 to vector<1x1xf32>
      %c0_37 = arith.constant 0 : index
      %c0_38 = arith.constant 0 : index
      %74 = vector.load %arg10[%c0_37, %c0_38] : memref<1x1xf32, #tpu.memory_space<vmem>>, vector<1x1xf32>
      tpu.vector_store %arg10[%c0_37, %c0_38], %73 {strides = array<i32>} : memref<1x1xf32, #tpu.memory_space<vmem>>, vector<1x1xf32>,
      %cst_39 = arith.constant 0.000000e+00 : f32
      %75 = vector.broadcast %cst_39 : f32 to vector<1x512xf32>
      %c0_40 = arith.constant 0 : index
      %c0_41 = arith.constant 0 : index
      %76 = vector.load %arg11[%c0_40, %c0_41] : memref<1x512xf32, #tpu.memory_space<vmem>>, vector<1x512xf32>
      tpu.vector_store %arg11[%c0_40, %c0_41], %75 {strides = array<i32>} : memref<1x512xf32, #tpu.memory_space<vmem>>, vector<1x512xf32>,
    } else {
    }
    %5 = tpu.iota {dimensions = array<i32: 0>} : vector<128x1xi32>
    %c128_i32 = arith.constant 128 : i32
    %6 = arith.muli %1, %c128_i32 : i32
    %7 = vector.broadcast %6 : i32 to vector<128x1xi32>
    %8 = arith.addi %7, %5 : vector<128x1xi32>
    %c300_i32 = arith.constant 300 : i32
    %9 = vector.broadcast %c300_i32 : i32 to vector<128x1xi32>
    %10 = arith.cmpi slt, %8, %9 : vector<128x1xi32>
    %c0 = arith.constant 0 : index
    %c0_1 = arith.constant 0 : index
    %11 = vector.load %arg2[%c0, %c0_1] : memref<128x512xf32, #tpu.memory_space<vmem>>, vector<128x512xf32>
    %cst = arith.constant 0.000000e+00 : f32
    %12 = vector.shape_cast %10 : vector<128x1xi1> to vector<128x1xi1>
    %13 = vector.broadcast %12 : vector<128x1xi1> to vector<128x512xi1>
    %14 = vector.broadcast %cst : f32 to vector<128x512xf32>
    %15 = arith.select %13, %11, %14 : vector<128x512xi1>, vector<128x512xf32>
    %16 = arith.truncf %15 : vector<128x512xf32> to vector<128x512xbf16>
    %c0_2 = arith.constant 0 : index
    %c0_3 = arith.constant 0 : index
    %17 = vector.load %arg3[%c0_2, %c0_3] : memref<512x256xbf16, #tpu.memory_space<vmem>>, vector<512x256xbf16>
    %cst_4 = arith.constant dense<0.000000e+00> : vector<128x256xf32>
    %18 = tpu.matmul %16, %17, %cst_4 {dimension_numbers = #tpu.dot_dimension_numbers<[1], [0], [0], [1], [0, 0, 1, 1], [], []>} : vector<128x512xbf16>, vector<512x256xbf16>, vector<128x256xf32> -> vector<128x256xf32>
    %19 = vector.extract_strided_slice %18 {offsets = [0, 0], sizes = [128, 128], strides = [1, 1]} : vector<128x256xf32> to vector<128x128xf32>
    %cst_5 = arith.constant 0.000000e+00 : f32
    %20 = vector.broadcast %cst_5 : f32 to vector<128x128xf32>
    %21 = arith.maximumf %19, %20 : vector<128x128xf32>
    %22 = vector.extract_strided_slice %18 {offsets = [0, 128], sizes = [128, 128], strides = [1, 1]} : vector<128x256xf32> to vector<128x128xf32>
    %23 = arith.negf %22 : vector<128x128xf32>
    %24 = math.exp %23 : vector<128x128xf32>
    %cst_6 = arith.constant 1.000000e+00 : f32
    %25 = vector.broadcast %cst_6 : f32 to vector<128x128xf32>
    %26 = arith.addf %25, %24 : vector<128x128xf32>
    %27 = arith.divf %25, %26 : vector<128x128xf32>
    %28 = arith.mulf %21, %27 : vector<128x128xf32>
    %29 = arith.truncf %28 : vector<128x128xf32> to vector<128x128xbf16>
    %c0_7 = arith.constant 0 : index
    %c0_8 = arith.constant 0 : index
    %30 = vector.load %arg4[%c0_7, %c0_8] : memref<1x128xbf16, #tpu.memory_space<vmem>>, vector<1x128xbf16>
    %cst_9 = arith.constant dense<0.000000e+00> : vector<1x128xf32>
    %31 = tpu.matmul %30, %29, %cst_9 {dimension_numbers = #tpu.dot_dimension_numbers<[1], [1], [0], [0], [0, 0, 1, 0], [], []>} : vector<1x128xbf16>, vector<128x128xbf16>, vector<1x128xf32> -> vector<1x128xf32>
    %32 = tpu.iota {dimensions = array<i32: 1>} : vector<1x128xi32>
    %c128_i32_10 = arith.constant 128 : i32
    %33 = arith.muli %1, %c128_i32_10 : i32
    %34 = vector.broadcast %33 : i32 to vector<1x128xi32>
    %35 = arith.addi %34, %32 : vector<1x128xi32>
    %c300_i32_11 = arith.constant 300 : i32
    %36 = vector.broadcast %c300_i32_11 : i32 to vector<1x128xi32>
    %37 = arith.cmpi slt, %35, %36 : vector<1x128xi32>
    %cst_12 = arith.constant 0xFF800000 : f32
    %38 = vector.broadcast %cst_12 : f32 to vector<1x128xf32>
    %39 = arith.select %37, %31, %38 : vector<1x128xi1>, vector<1x128xf32>
    %c0_13 = arith.constant 0 : index
    %c0_14 = arith.constant 0 : index
    %40 = vector.load %arg5[%c0_13, %c0_14] : memref<1x128xf32, #tpu.memory_space<vmem>>, vector<1x128xf32>
    tpu.vector_store %arg5[%c0_13, %c0_14], %39 {strides = array<i32>} : memref<1x128xf32, #tpu.memory_space<vmem>>, vector<1x128xf32>,
    %c0_15 = arith.constant 0 : index
    %c0_16 = arith.constant 0 : index
    %41 = vector.load %arg9[%c0_15, %c0_16] : memref<1x1xf32, #tpu.memory_space<vmem>>, vector<1x1xf32>
    %cst_17 = arith.constant dense<0xFF800000> : vector<1xf32>
    %42 = vector.multi_reduction <maximumf>, %39, %cst_17 [1] : vector<1x128xf32> to vector<1xf32>
    %43 = vector.shape_cast %42 : vector<1xf32> to vector<1x1xf32>
    %44 = arith.maximumf %41, %43 : vector<1x1xf32>
    %cst_18 = arith.constant 0xFF800000 : f32
    %45 = vector.broadcast %cst_18 : f32 to vector<1x1xf32>
    %46 = arith.cmpf oeq, %44, %45 : vector<1x1xf32>
    %cst_19 = arith.constant 0.000000e+00 : f32
    %47 = vector.broadcast %cst_19 : f32 to vector<1x1xf32>
    %48 = arith.select %46, %47, %44 : vector<1x1xi1>, vector<1x1xf32>
    %49 = arith.subf %41, %48 : vector<1x1xf32>
    %50 = math.exp %49 : vector<1x1xf32>
    %51 = vector.broadcast %48 : vector<1x1xf32> to vector<1x128xf32>
    %52 = arith.subf %39, %51 : vector<1x128xf32>
    %53 = math.exp %52 : vector<1x128xf32>
    %c0_20 = arith.constant 0 : index
    %c0_21 = arith.constant 0 : index
    %54 = vector.load %arg10[%c0_20, %c0_21] : memref<1x1xf32, #tpu.memory_space<vmem>>, vector<1x1xf32>
    %55 = arith.mulf %50, %54 : vector<1x1xf32>
    %cst_22 = arith.constant dense<0.000000e+00> : vector<1xf32>
    %56 = vector.multi_reduction <add>, %53, %cst_22 [1] : vector<1x128xf32> to vector<1xf32>
    %57 = vector.shape_cast %56 : vector<1xf32> to vector<1x1xf32>
    %58 = arith.addf %55, %57 : vector<1x1xf32>
    %c0_23 = arith.constant 0 : index
    %c0_24 = arith.constant 0 : index
    %59 = vector.load %arg10[%c0_23, %c0_24] : memref<1x1xf32, #tpu.memory_space<vmem>>, vector<1x1xf32>
    tpu.vector_store %arg10[%c0_23, %c0_24], %58 {strides = array<i32>} : memref<1x1xf32, #tpu.memory_space<vmem>>, vector<1x1xf32>,
    %60 = arith.truncf %53 : vector<1x128xf32> to vector<1x128xbf16>
    %cst_25 = arith.constant dense<0.000000e+00> : vector<1x512xf32>
    %61 = tpu.matmul %60, %16, %cst_25 {dimension_numbers = #tpu.dot_dimension_numbers<[1], [0], [0], [1], [0, 0, 1, 1], [], []>} : vector<1x128xbf16>, vector<128x512xbf16>, vector<1x512xf32> -> vector<1x512xf32>
    %c0_26 = arith.constant 0 : index
    %c0_27 = arith.constant 0 : index
    %62 = vector.load %arg11[%c0_26, %c0_27] : memref<1x512xf32, #tpu.memory_space<vmem>>, vector<1x512xf32>
    %63 = vector.broadcast %50 : vector<1x1xf32> to vector<1x512xf32>
    %64 = arith.mulf %63, %62 : vector<1x512xf32>
    %65 = arith.addf %64, %61 : vector<1x512xf32>
    %c0_28 = arith.constant 0 : index
    %c0_29 = arith.constant 0 : index
    %66 = vector.load %arg11[%c0_28, %c0_29] : memref<1x512xf32, #tpu.memory_space<vmem>>, vector<1x512xf32>
    tpu.vector_store %arg11[%c0_28, %c0_29], %65 {strides = array<i32>} : memref<1x512xf32, #tpu.memory_space<vmem>>, vector<1x512xf32>,
    %c0_30 = arith.constant 0 : index
    %c0_31 = arith.constant 0 : index
    %67 = vector.load %arg9[%c0_30, %c0_31] : memref<1x1xf32, #tpu.memory_space<vmem>>, vector<1x1xf32>
    tpu.vector_store %arg9[%c0_30, %c0_31], %44 {strides = array<i32>} : memref<1x1xf32, #tpu.memory_space<vmem>>, vector<1x1xf32>,
    %c1_i32 = arith.constant 1 : i32
    %68 = arith.cmpi eq, %arg1, %c1_i32 : i32
    %69 = arith.extui %68 : i1 to i32
    %c0_i32_32 = arith.constant 0 : i32
    %70 = arith.cmpi ne, %69, %c0_i32_32 : i32
    scf.if %70 {
      %c0_33 = arith.constant 0 : index
      %c0_34 = arith.constant 0 : index
      %71 = vector.load %arg9[%c0_33, %c0_34] : memref<1x1xf32, #tpu.memory_space<vmem>>, vector<1x1xf32>
      %72 = vector.shape_cast %71 : vector<1x1xf32> to vector<1x1x1xf32>
      %c0_35 = arith.constant 0 : index
      %c0_36 = arith.constant 0 : index
      %c0_37 = arith.constant 0 : index
      %73 = vector.load %arg6[%c0_35, %c0_36, %c0_37] : memref<1x1x1xf32, #tpu.memory_space<vmem>>, vector<1x1x1xf32>
      tpu.vector_store %arg6[%c0_35, %c0_36, %c0_37], %72 {strides = array<i32>} : memref<1x1x1xf32, #tpu.memory_space<vmem>>, vector<1x1x1xf32>,
      %c0_38 = arith.constant 0 : index
      %c0_39 = arith.constant 0 : index
      %74 = vector.load %arg10[%c0_38, %c0_39] : memref<1x1xf32, #tpu.memory_space<vmem>>, vector<1x1xf32>
      %75 = vector.shape_cast %74 : vector<1x1xf32> to vector<1x1x1xf32>
      %c0_40 = arith.constant 0 : index
      %c0_41 = arith.constant 0 : index
      %c0_42 = arith.constant 0 : index
      %76 = vector.load %arg7[%c0_40, %c0_41, %c0_42] : memref<1x1x1xf32, #tpu.memory_space<vmem>>, vector<1x1x1xf32>
      tpu.vector_store %arg7[%c0_40, %c0_41, %c0_42], %75 {strides = array<i32>} : memref<1x1x1xf32, #tpu.memory_space<vmem>>, vector<1x1x1xf32>,
      %c0_43 = arith.constant 0 : index
      %c0_44 = arith.constant 0 : index
      %77 = vector.load %arg11[%c0_43, %c0_44] : memref<1x512xf32, #tpu.memory_space<vmem>>, vector<1x512xf32>
      %78 = vector.shape_cast %77 : vector<1x512xf32> to vector<1x1x512xf32>
      %c0_45 = arith.constant 0 : index
      %c0_46 = arith.constant 0 : index
      %c0_47 = arith.constant 0 : index
      %79 = vector.load %arg8[%c0_45, %c0_46, %c0_47] : memref<1x1x512xf32, #tpu.memory_space<vmem>>, vector<1x1x512xf32>
      tpu.vector_store %arg8[%c0_45, %c0_46, %c0_47], %78 {strides = array<i32>} : memref<1x1x512xf32, #tpu.memory_space<vmem>>, vector<1x1x512xf32>,
    } else {
    }
    return
  }
  func.func @transform_0(%arg0: i32, %arg1: i32) -> (i32, i32) {
    %c2_i32 = arith.constant 2 : i32
    %0 = arith.muli %arg0, %c2_i32 : i32
    %1 = arith.addi %0, %arg1 : i32
    %c2_i32_0 = arith.constant 2 : i32
    %2 = arith.minsi %1, %c2_i32_0 : i32
    %c0_i32 = arith.constant 0 : i32
    %c0_i32_1 = arith.constant 0 : i32
    return %2, %c0_i32 : i32, i32
  }
  func.func @transform_1(%arg0: i32, %arg1: i32) -> (i32, i32) {
    %c0_i32 = arith.constant 0 : i32
    %c0_i32_0 = arith.constant 0 : i32
    %c0_i32_1 = arith.constant 0 : i32
    return %c0_i32, %c0_i32_0 : i32, i32
  }
  func.func @transform_2(%arg0: i32, %arg1: i32) -> (i32, i32) {
    %c0_i32 = arith.constant 0 : i32
    %c0_i32_0 = arith.constant 0 : i32
    %c0_i32_1 = arith.constant 0 : i32
    return %c0_i32, %c0_i32_0 : i32, i32
  }
  func.func @transform_3(%arg0: i32, %arg1: i32) -> (i32, i32) {
    %c2_i32 = arith.constant 2 : i32
    %0 = arith.muli %arg0, %c2_i32 : i32
    %1 = arith.addi %0, %arg1 : i32
    %c0_i32 = arith.constant 0 : i32
    %c0_i32_0 = arith.constant 0 : i32
    return %c0_i32, %1 : i32, i32
  }
  func.func @transform_4(%arg0: i32, %arg1: i32) -> (i32, i32, i32) {
    %c0_i32 = arith.constant 0 : i32
    %c0_i32_0 = arith.constant 0 : i32
    %c0_i32_1 = arith.constant 0 : i32
    return %arg0, %c0_i32, %c0_i32_0 : i32, i32, i32
  }
  func.func @transform_5(%arg0: i32, %arg1: i32) -> (i32, i32, i32) {
    %c0_i32 = arith.constant 0 : i32
    %c0_i32_0 = arith.constant 0 : i32
    %c0_i32_1 = arith.constant 0 : i32
    return %arg0, %c0_i32, %c0_i32_0 : i32, i32, i32
  }
  func.func @transform_6(%arg0: i32, %arg1: i32) -> (i32, i32, i32) {
    %c0_i32 = arith.constant 0 : i32
    %c0_i32_0 = arith.constant 0 : i32
    %c0_i32_1 = arith.constant 0 : i32
    return %arg0, %c0_i32, %c0_i32_0 : i32, i32, i32
  }
}

</mosaic_0001>

<llo_original>
// kernel: tpu_custom_call.1
$region0: #{tpu_custom_call.1}
  #allocation0 [shape = 'u32[]', space=smem, size = 0x4, offset = 0x4, fixed_abs, tag = 'smem constant byte address 0x4 - core index']
  #allocation1 [shape = 'u32[72,128]{1,0:T(1,128)}', space=vmem, size = 0x9000, scoped, tag = 'internal scratch']
  #allocation2 [shape = 'f32[1,1]{1,0:T(1,128)}', space=vmem, size = 0x200, scoped, tag = 'scratch operand']
  #allocation3 [shape = 'f32[1,1]{1,0:T(1,128)}', space=vmem, size = 0x200, scoped, tag = 'scratch operand']
  #allocation4 [shape = 'f32[1,512]{1,0:T(1,128)}', space=vmem, size = 0x800, scoped, tag = 'scratch operand']
  %s0 = inlined_call_operand.hbm [shape: f32[300,512], index: 0, kind: input, shape index: {}]
  %s1 = inlined_call_operand.hbm [shape: bf16[512,256], index: 1, kind: input, shape index: {}]
  %s2 = inlined_call_operand.vmem [shape: bf16[1,128], index: 2, kind: input, shape index: {}]
  %s3 = inlined_call_operand.hbm [shape: f32[1,512], index: 3, kind: output, shape index: {0}]
  %s4 = inlined_call_operand.vmem [shape: f32[2,1,1], index: 4, kind: output, shape index: {1}]
  %s5 = inlined_call_operand.vmem [shape: f32[2,1,1], index: 5, kind: output, shape index: {2}]
  %s6 = inlined_call_operand.hbm [shape: f32[2,1,512], index: 6, kind: output, shape index: {3}]
  %7 = xla_tuple %s3, %s4, %s5, %s6
  %s8 = sld [smem:[#allocation0]]
  $region85: #{tpu_custom_call.1} parent=0
    _
  %s10 = ssub.s32 1, %s8
  %s11 = scalar_select 0, %s10, %s8
  $region1: #{tpu_custom_call.1} parent=0
    #allocation5 [shape = 'u8[524288]{0}', space=vmem, size = 0x80000, scoped, tag = 'input window, operand 0']
    #allocation6 [shape = 's32[2]{0}', space=sflag, size = 0x8, scoped, tag = 'scoped memory for tpu_custom_call.1']
    #allocation7 [shape = 's32[2]{0}', space=sflag, size = 0x8, scoped, tag = 'scoped memory for tpu_custom_call.1']
    #allocation8 [shape = 'u8[262144]{0}', space=vmem, size = 0x40000, scoped, tag = 'input window, operand 1, single buffered']
    #allocation9 [shape = 's32[1]{0}', space=sflag, size = 0x4, scoped, tag = 'scoped memory for tpu_custom_call.1']
    #allocation10 [shape = 'u8[1024]{0}', space=vmem, size = 0x400, scoped, tag = 'output window, operand 0']
    #allocation11 [shape = 'u8[4096]{0}', space=vmem, size = 0x1000, scoped, tag = 'output window, operand 3']
    #allocation12 [shape = 's32[2]{0}', space=sflag, size = 0x8, scoped, tag = 'scoped memory for tpu_custom_call.1']
    %12 = vsyncpa [#allocation6], 0
    %s13 = scalar_lea.sflag [#allocation6], 1
    %14 = vsyncpa %s13, 0
    %15 = vsyncpa [#allocation9], 0
    %16 = vsyncpa [#allocation7], 0
    %s17 = scalar_lea.sflag [#allocation7], 1
    %18 = vsyncpa %s17, 0
    %19 = vsyncpa [#allocation12], 0
    %s20 = scalar_lea.sflag [#allocation12], 1
    %21 = vsyncpa %s20, 0
    loop: start=0, step=1, limit=6
    $region2: #{tpu_custom_call.1} parent=1 // loop_pre_header
      _
    $region3: #{tpu_custom_call.1} parent=1 // loop_header
      %s23 = sphi 0, %s27
      %p24 = scmp.ge.s32.totalorder %s23, 6
      %s30 = sphi 0, %s42
      %s31 = sphi 0, %s38
      %s32 = sphi 0, %s30
      %s33 = sphi 0, %s31
      %s34 = sphi 0, %s32
      %s35 = sphi 0, %s33
      %s53 = sphi 0, %s55
      %s56 = sphi 0, %s53
      %s57 = sphi 0, %s56
      %s73 = sphi 0, %s57
      %s77 = sphi 0, %s77
      %s79 = sphi 0, %s77
      %s80 = sphi 0, %s79
      %s94 = sphi 0, %s80
      %s98 = sphi 0, %s98
      %s100 = sphi 0, %s98
      %s101 = sphi 0, %s100
      %s115 = sphi 0, %s101
      %s125 = sphi 0, %s127
      %s128 = sphi 0, %s125
      %s129 = sphi 0, %s128
      %s145 = sphi 0, %s129
      %s151 = sphi 0, %s153
      %s154 = sphi 0, %s151
      %s155 = sphi 0, %s154
      %s171 = sphi 0, %s155
      %s177 = sphi 0, %s179
      %s180 = sphi 0, %s177
      %s181 = sphi 0, %s180
      %s197 = sphi 0, %s181
      %s203 = sphi 0, %s205
      %s206 = sphi 0, %s203
      %s207 = sphi 0, %s206
      %s223 = sphi 0, %s207
    $region4: #{tpu_custom_call.1} parent=1 // loop_header_branch
      %26 = sbr.rel (%p24) target = $region8
    $region5: #{tpu_custom_call.1} parent=1 // loop_body
      %s28 = ssub.s32 %s23, 1
      %s29 = ssub.s32 %s23, 2
      %s36 = sadd.s32 1, %s31
      %p37 = scmp.ge.s32.totalorder %s36, 2
      %s38 = scalar_select %p37, 0, %s36
      %s39 = sadd.s32 1, %s30
      %s40 = scalar_select %p37, %s39, %s30
      %p41 = scmp.ge.s32.totalorder %s40, 2
      %s42 = scalar_select %p41, 0, %s40
      %s43 = smul.u32 %s30, 2
      %s44 = sadd.s32 %s43, %s31
      %p45 = scmp.lt.s32.totalorder %s44, 2
      %s46 = scalar_select %p45, %s44, 2
      %s47 = smul.u32 %s42, 2
      %s48 = sadd.s32 %s47, %s38
      %p49 = scmp.lt.s32.totalorder %s48, 2
      %s50 = scalar_select %p49, %s48, 2
      %s51 = ssub.s32 %s46, %s50
      %p52 = scmp.eq.s32.totalorder %s51, 0
      %s54 = sadd.s32 %s53, 1
      %s55 = scalar_select %p52, %s53, %s54
      %p58 = pneg %p52
      %p59 = scmp.eq.s32.totalorder %s23, 3
      %p60 = por %p58, %p59
      %p61 = scmp.ne.s32.totalorder %s53, %s56
      %p62 = scmp.eq.s32.totalorder %s23, 0
      %p63 = por %p61, %p62
      %p64 = scmp.ne.s32.totalorder %s53, %s56
      %p65 = scmp.eq.s32.totalorder %s28, 3
      %p66 = por %p64, %p65
      %p67 = scmp.ne.s32.totalorder %s56, %s57
      %p68 = scmp.eq.s32.totalorder %s28, 0
      %p69 = por %p67, %p68
      %p70 = scmp.ne.s32.totalorder %s56, %s57
      %p71 = scmp.eq.s32.totalorder %s29, 3
      %p72 = por %p70, %p71
      %p74 = scmp.ne.s32.totalorder %s57, %s73
      %p75 = scmp.eq.s32.totalorder %s29, 0
      %p76 = por %p74, %p75
      %s78 = sadd.s32 %s77, 1
      %p81 = scmp.eq.s32.totalorder %s23, 3
      %p82 = scmp.ne.s32.totalorder %s77, %s79
      %p83 = scmp.eq.s32.totalorder %s23, 0
      %p84 = por %p82, %p83
      %p85 = scmp.ne.s32.totalorder %s77, %s79
      %p86 = scmp.eq.s32.totalorder %s28, 3
      %p87 = por %p85, %p86
      %p88 = scmp.ne.s32.totalorder %s79, %s80
      %p89 = scmp.eq.s32.totalorder %s28, 0
      %p90 = por %p88, %p89
      %p91 = scmp.ne.s32.totalorder %s79, %s80
      %p92 = scmp.eq.s32.totalorder %s29, 3
      %p93 = por %p91, %p92
      %p95 = scmp.ne.s32.totalorder %s80, %s94
      %p96 = scmp.eq.s32.totalorder %s29, 0
      %p97 = por %p95, %p96
      %s99 = sadd.s32 %s98, 1
      %p102 = scmp.eq.s32.totalorder %s23, 3
      %p103 = scmp.ne.s32.totalorder %s98, %s100
      %p104 = scmp.eq.s32.totalorder %s23, 0
      %p105 = por %p103, %p104
      %p106 = scmp.ne.s32.totalorder %s98, %s100
      %p107 = scmp.eq.s32.totalorder %s28, 3
      %p108 = por %p106, %p107
      %p109 = scmp.ne.s32.totalorder %s100, %s101
      %p110 = scmp.eq.s32.totalorder %s28, 0
      %p111 = por %p109, %p110
      %p112 = scmp.ne.s32.totalorder %s100, %s101
      %p113 = scmp.eq.s32.totalorder %s29, 3
      %p114 = por %p112, %p113
      %p116 = scmp.ne.s32.totalorder %s101, %s115
      %p117 = scmp.eq.s32.totalorder %s29, 0
      %p118 = por %p116, %p117
      %s119 = smul.u32 %s30, 2
      %s120 = sadd.s32 %s119, %s31
      %s121 = smul.u32 %s42, 2
      %s122 = sadd.s32 %s121, %s38
      %s123 = ssub.s32 %s120, %s122
      %p124 = scmp.eq.s32.totalorder %s123, 0
      %s126 = sadd.s32 %s125, 1
      %s127 = scalar_select %p124, %s125, %s126
      %p130 = pneg %p124
      %p131 = scmp.eq.s32.totalorder %s23, 3
      %p132 = por %p130, %p131
      %p133 = scmp.ne.s32.totalorder %s125, %s128
      %p134 = scmp.eq.s32.totalorder %s23, 0
      %p135 = por %p133, %p134
      %p136 = scmp.ne.s32.totalorder %s125, %s128
      %p137 = scmp.eq.s32.totalorder %s28, 3
      %p138 = por %p136, %p137
      %p139 = scmp.ne.s32.totalorder %s128, %s129
      %p140 = scmp.eq.s32.totalorder %s28, 0
      %p141 = por %p139, %p140
      %p142 = scmp.ne.s32.totalorder %s128, %s129
      %p143 = scmp.eq.s32.totalorder %s29, 3
      %p144 = por %p142, %p143
      %p146 = scmp.ne.s32.totalorder %s129, %s145
      %p147 = scmp.eq.s32.totalorder %s29, 0
      %p148 = por %p146, %p147
      %s149 = ssub.s32 %s30, %s42
      %p150 = scmp.eq.s32.totalorder %s149, 0
      %s152 = sadd.s32 %s151, 1
      %s153 = scalar_select %p150, %s151, %s152
      %p156 = pneg %p150
      %p157 = scmp.eq.s32.totalorder %s23, 3
      %p158 = por %p156, %p157
      %p159 = scmp.ne.s32.totalorder %s151, %s154
      %p160 = scmp.eq.s32.totalorder %s23, 0
      %p161 = por %p159, %p160
      %p162 = scmp.ne.s32.totalorder %s151, %s154
      %p163 = scmp.eq.s32.totalorder %s28, 3
      %p164 = por %p162, %p163
      %p165 = scmp.ne.s32.totalorder %s154, %s155
      %p166 = scmp.eq.s32.totalorder %s28, 0
      %p167 = por %p165, %p166
      %p168 = scmp.ne.s32.totalorder %s154, %s155
      %p169 = scmp.eq.s32.totalorder %s29, 3
      %p170 = por %p168, %p169
      %p172 = scmp.ne.s32.totalorder %s155, %s171
      %p173 = scmp.eq.s32.totalorder %s29, 0
      %p174 = por %p172, %p173
      %s175 = ssub.s32 %s30, %s42
      %p176 = scmp.eq.s32.totalorder %s175, 0
      %s178 = sadd.s32 %s177, 1
      %s179 = scalar_select %p176, %s177, %s178
      %p182 = pneg %p176
      %p183 = scmp.eq.s32.totalorder %s23, 3
      %p184 = por %p182, %p183
      %p185 = scmp.ne.s32.totalorder %s177, %s180
      %p186 = scmp.eq.s32.totalorder %s23, 0
      %p187 = por %p185, %p186
      %p188 = scmp.ne.s32.totalorder %s177, %s180
      %p189 = scmp.eq.s32.totalorder %s28, 3
      %p190 = por %p188, %p189
      %p191 = scmp.ne.s32.totalorder %s180, %s181
      %p192 = scmp.eq.s32.totalorder %s28, 0
      %p193 = por %p191, %p192
      %p194 = scmp.ne.s32.totalorder %s180, %s181
      %p195 = scmp.eq.s32.totalorder %s29, 3
      %p196 = por %p194, %p195
      %p198 = scmp.ne.s32.totalorder %s181, %s197
      %p199 = scmp.eq.s32.totalorder %s29, 0
      %p200 = por %p198, %p199
      %s201 = ssub.s32 %s30, %s42
      %p202 = scmp.eq.s32.totalorder %s201, 0
      %s204 = sadd.s32 %s203, 1
      %s205 = scalar_select %p202, %s203, %s204
      %p208 = pneg %p202
      %p209 = scmp.eq.s32.totalorder %s23, 3
      %p210 = por %p208, %p209
      %p211 = scmp.ne.s32.totalorder %s203, %s206
      %p212 = scmp.eq.s32.totalorder %s23, 0
      %p213 = por %p211, %p212
      %p214 = scmp.ne.s32.totalorder %s203, %s206
      %p215 = scmp.eq.s32.totalorder %s28, 3
      %p216 = por %p214, %p215
      %p217 = scmp.ne.s32.totalorder %s206, %s207
      %p218 = scmp.eq.s32.totalorder %s28, 0
      %p219 = por %p217, %p218
      %p220 = scmp.ne.s32.totalorder %s206, %s207
      %p221 = scmp.eq.s32.totalorder %s29, 3
      %p222 = por %p220, %p221
      %p224 = scmp.ne.s32.totalorder %s207, %s223
      %p225 = scmp.eq.s32.totalorder %s29, 0
      %p226 = por %p224, %p225
      %p227 = scmp.le.s32.totalorder 1, %s23
      %p228 = scmp.lt.s32.totalorder %s23, 5
      %p229 = pnand %p227, %p228
      %p230 = pneg %p229
      // Predicated region
      $region9: #{tpu_custom_call.1} parent=5 // pred_check
        _
      $region10: #{tpu_custom_call.1} parent=5 // pred_check_branch
        %232 = sbr.rel (%p229) target = $region12
      $region11: #{tpu_custom_call.1} parent=5 // pred_region
        %s233 = ssub.s32 %s23, 1
        // Predicated region
        $region13: #{tpu_custom_call.1} parent=11 // pred_check
          %p234 = pneg %p90
        $region14: #{tpu_custom_call.1} parent=11 // pred_check_branch
          %236 = sbr.rel (%p234) target = $region16
        $region15: #{tpu_custom_call.1} parent=11 // pred_region
          %238 = vsyncadd [#allocation9], 0
          %s239 = sshll.u32 %s1, 4
          %s240 = int_to_ptr.hbm [resolvable:$true] %s239
          %s241 = sshll.u32 [#allocation8], 4
          %s242 = int_to_ptr.vmem [resolvable:$true] %s241
          %247 = dma.hbm_to_vmem [thread:$0]  %s240, 8192, %s242, [#allocation9], 128, 128, 8
        $region16: #{tpu_custom_call.1} parent=11 // pred_fallthru
          _
        // Predicated region
        $region17: #{tpu_custom_call.1} parent=11 // pred_check
          %p248 = pneg %p111
        $region18: #{tpu_custom_call.1} parent=11 // pred_check_branch
          %250 = sbr.rel (%p248) target = $region20
        $region19: #{tpu_custom_call.1} parent=11 // pred_region
          _
        $region20: #{tpu_custom_call.1} parent=11 // pred_fallthru
          _
      $region12: #{tpu_custom_call.1} parent=5 // pred_fallthru
        _
      %p251 = scmp.lt.s32.totalorder %s23, 4
      // Predicated region
      $region21: #{tpu_custom_call.1} parent=5 // pred_check
        %p252 = pneg %p251
      $region22: #{tpu_custom_call.1} parent=5 // pred_check_branch
        %254 = sbr.rel (%p252) target = $region24
      $region23: #{tpu_custom_call.1} parent=5 // pred_region
        // Predicated region
        $region25: #{tpu_custom_call.1} parent=23 // pred_check
          %p255 = pneg %p63
        $region26: #{tpu_custom_call.1} parent=23 // pred_check_branch
          %257 = sbr.rel (%p255) target = $region28
        $region27: #{tpu_custom_call.1} parent=23 // pred_region
          %s258 = sand.u32 %s53, 1
          %s259 = scalar_lea.sflag [#allocation6], %s258
          %s260 = sand.u32 %s53, 1
          %s261 = smul.addr %s260, 512
          %s262 = scalar_lea.vmem [#allocation5], %s261
          %s263 = smul.u32 %s30, 2
          %s264 = sadd.s32 %s263, %s31
          %p265 = scmp.lt.s32.totalorder %s264, 2
          %s266 = scalar_select %p265, %s264, 2
          %s267 = smul.u32 16, %s266
          %s268 = ssub.s32 38, %s267
          %p269 = scmp.lt.s32.totalorder %s268, 16
          %s270 = scalar_select %p269, %s268, 16
          %s271 = smul.u32 8, %s270
          %s272 = smul.u32 %s271, 4
          %s273 = ssub.s32 512, %s272
          %s274 = sshll.u32 %s273, 4
          %275 = vsyncadd %s259, %s274
          %p276 = scmp.ne.s32.totalorder 0, %s272
          %s277 = smul.addr %s267, 4
          %s278 = smul.addr %s277, 8
          %s279 = scalar_lea.hbm %s0, %s278
          %s280 = smul.u32 32, %s270
          %s281 = sshll.u32 %s279, 4
          %s282 = int_to_ptr.hbm [resolvable:$true] %s281
          %s283 = sshll.u32 %s262, 4
          %s284 = int_to_ptr.vmem [resolvable:$true] %s283
          %s285 = sshll.u32 %s280, 4
          %289 = dma.hbm_to_vmem [thread:$0]  (%p276), %s282, %s285, %s284, %s259, 512, 512, 32
        $region28: #{tpu_custom_call.1} parent=23 // pred_fallthru
          _
      $region24: #{tpu_custom_call.1} parent=5 // pred_fallthru
        _
      %p290 = scmp.le.s32.totalorder 1, %s23
      %p291 = scmp.lt.s32.totalorder %s23, 5
      %p292 = pnand %p290, %p291
      %p293 = pneg %p292
      // Predicated region
      $region29: #{tpu_custom_call.1} parent=5 // pred_check
        _
      $region30: #{tpu_custom_call.1} parent=5 // pred_check_branch
        %295 = sbr.rel (%p292) target = $region32
      $region31: #{tpu_custom_call.1} parent=5 // pred_region
        %s296 = ssub.s32 %s23, 1
        %s297 = sand.u32 %s56, 1
        %s298 = scalar_lea.sflag [#allocation6], %s297
        %s299 = sand.u32 %s56, 1
        %s300 = smul.addr %s299, 512
        %s301 = scalar_lea.vmem [#allocation5], %s300
        // Predicated region
        $region33: #{tpu_custom_call.1} parent=31 // pred_check
          %p302 = pneg %p69
        $region34: #{tpu_custom_call.1} parent=31 // pred_check_branch
          %304 = sbr.rel (%p302) target = $region36
        $region35: #{tpu_custom_call.1} parent=31 // pred_region
          %306 = dma.done %s298, 8192
        $region36: #{tpu_custom_call.1} parent=31 // pred_fallthru
          _
        // Predicated region
        $region37: #{tpu_custom_call.1} parent=31 // pred_check
          %p307 = pneg %p90
        $region38: #{tpu_custom_call.1} parent=31 // pred_check_branch
          %309 = sbr.rel (%p307) target = $region40
        $region39: #{tpu_custom_call.1} parent=31 // pred_region
          %311 = dma.done [#allocation9], 8192
        $region40: #{tpu_custom_call.1} parent=31 // pred_fallthru
          _
        %s312 = sand.u32 %s56, 1
        %s313 = scalar_lea.sflag [#allocation6], %s312
        %s314 = sand.u32 %s56, 1
        %s315 = smul.addr %s314, 512
        %s316 = scalar_lea.vmem [#allocation5], %s315
        %p317 = pneg %p69
        %p318 = pneg %p66
        %p319 = pneg %p90
        %p320 = pneg %p87
        %p321 = pneg %p111
        %p322 = pneg %p108
        %p323 = pneg %p141
        %p324 = pneg %p138
        %s325 = sand.u32 %s128, 1
        %s326 = scalar_lea.sflag [#allocation7], %s325
        %s327 = sand.u32 %s128, 1
        %s328 = scalar_lea.vmem [#allocation10], %s327
        %p329 = pneg %p167
        %p330 = pneg %p164
        %p331 = scmp.lt.s32.totalorder %s32, 1
        %s332 = scalar_select %p331, %s32, 1
        %s333 = scalar_lea.vmem %s4, %s332
        %p334 = pneg %p193
        %p335 = pneg %p190
        %p336 = scmp.lt.s32.totalorder %s32, 1
        %s337 = scalar_select %p336, %s32, 1
        %s338 = scalar_lea.vmem %s5, %s337
        %p339 = pneg %p219
        %p340 = pneg %p216
        %s341 = sand.u32 %s206, 1
        %s342 = scalar_lea.sflag [#allocation12], %s341
        %s343 = sand.u32 %s206, 1
        %s344 = smul.addr %s343, 4
        %s345 = scalar_lea.vmem [#allocation11], %s344
        %s346 = smul.u32 %s32, 2
        %s347 = sadd.s32 %s346, %s33
        %p348 = scmp.lt.s32.totalorder %s347, 2
        %s349 = scalar_select %p348, %s347, 2
        %s350 = smul.u32 16, %s349
        %s351 = ssub.s32 38, %s350
        %p352 = scmp.lt.s32.totalorder %s351, 16
        %s353 = scalar_select %p352, %s351, 16
        %s354 = smul.u32 8, %s353
        %s355 = smul.u32 %s354, 4
        %s356 = smul.u32 %s32, 2
        %s357 = sadd.s32 %s356, %s33
        %p358 = scmp.lt.s32.totalorder %s32, 1
        %s359 = scalar_select %p358, %s32, 1
        %s360 = scalar_lea.vmem %s4, %s359
        %p361 = scmp.lt.s32.totalorder %s32, 1
        %s362 = scalar_select %p361, %s32, 1
        %s363 = scalar_lea.vmem %s5, %s362
        %s364 = smul.u32 %s32, 2
        %s365 = sadd.s32 %s364, %s33
        %p366 = scmp.eq.s32.totalorder %s33, 0
        // Predicated region
        $region41: #{tpu_custom_call.1} parent=31 // pred_check
          %p367 = pneg %p366
        $region42: #{tpu_custom_call.1} parent=31 // pred_check_branch
          %369 = sbr.rel (%p367) target = $region44
        $region43: #{tpu_custom_call.1} parent=31 // pred_region
          %vm370 = vcmask 0
          %371 = vst.msk [vmem:[#allocation2] sm:$0x1] %vm370, -inf
          %372 = vst.msk [vmem:[#allocation3] sm:$0x1] %vm370, 0.0
          %v373 = vlaneseq
          %vm374 = vcmp.ge.s32.totalorder %v373, 0
          %vm375 = vcmp.lt.s32.totalorder %v373, 512
          %vm376 = vmand %vm374, %vm375
          %377 = vst.msk [vmem:[#allocation4] sm:$0xf] %vm376, 0.0
        $region44: #{tpu_custom_call.1} parent=31 // pred_fallthru
          _
        %v378 = vlaneseq
        %v379 = vshrl.u32 %v378, 7
        %v380 = vadd.s32 %v379, 8
        %v381 = vadd.s32 %v379, 16
        %v382 = vadd.s32 %v379, 24
        %v383 = vadd.s32 %v379, 32
        %v384 = vadd.s32 %v379, 40
        %v385 = vadd.s32 %v379, 48
        %v386 = vadd.s32 %v379, 56
        %v387 = vadd.s32 %v379, 64
        %v388 = vadd.s32 %v379, 72
        %v389 = vadd.s32 %v379, 80
        %v390 = vadd.s32 %v379, 88
        %v391 = vadd.s32 %v379, 96
        %v392 = vadd.s32 %v379, 104
        %v393 = vadd.s32 %v379, 112
        %v394 = vadd.s32 %v379, 120
        %s395 = smul.u32 %s365, 128
        %v396 = vstv %s395
        %v397 = vadd.s32 %v396, %v379
        %v398 = vadd.s32 %v396, %v380
        %v399 = vadd.s32 %v396, %v381
        %v400 = vadd.s32 %v396, %v382
        %v401 = vadd.s32 %v396, %v383
        %v402 = vadd.s32 %v396, %v384
        %v403 = vadd.s32 %v396, %v385
        %v404 = vadd.s32 %v396, %v386
        %v405 = vadd.s32 %v396, %v387
        %v406 = vadd.s32 %v396, %v388
        %v407 = vadd.s32 %v396, %v389
        %v408 = vadd.s32 %v396, %v390
        %v409 = vadd.s32 %v396, %v391
        %v410 = vadd.s32 %v396, %v392
        %v411 = vadd.s32 %v396, %v393
        %v412 = vadd.s32 %v396, %v394
        %vm413 = vcmp.lt.s32.totalorder %v397, 300
        %vm414 = vcmp.lt.s32.totalorder %v398, 300
        %vm415 = vcmp.lt.s32.totalorder %v399, 300
        %vm416 = vcmp.lt.s32.totalorder %v400, 300
        %vm417 = vcmp.lt.s32.totalorder %v401, 300
        %vm418 = vcmp.lt.s32.totalorder %v402, 300
        %vm419 = vcmp.lt.s32.totalorder %v403, 300
        %vm420 = vcmp.lt.s32.totalorder %v404, 300
        %vm421 = vcmp.lt.s32.totalorder %v405, 300
        %vm422 = vcmp.lt.s32.totalorder %v406, 300
        %vm423 = vcmp.lt.s32.totalorder %v407, 300
        %vm424 = vcmp.lt.s32.totalorder %v408, 300
        %vm425 = vcmp.lt.s32.totalorder %v409, 300
        %vm426 = vcmp.lt.s32.totalorder %v410, 300
        %vm427 = vcmp.lt.s32.totalorder %v411, 300
        %vm428 = vcmp.lt.s32.totalorder %v412, 300
        %v429 = vld [vmem:[%s301] sm:$0xff]
        %v430 = vld [vmem:[%s301 + $0x8] sm:$0xff]
        %v431 = vld [vmem:[%s301 + $0x10] sm:$0xff]
        %v432 = vld [vmem:[%s301 + $0x18] sm:$0xff]
        %v433 = vld [vmem:[%s301 + $0x20] sm:$0xff]
        %v434 = vld [vmem:[%s301 + $0x28] sm:$0xff]
        %v435 = vld [vmem:[%s301 + $0x30] sm:$0xff]
        %v436 = vld [vmem:[%s301 + $0x38] sm:$0xff]
        %v437 = vld [vmem:[%s301 + $0x40] sm:$0xff]
        %v438 = vld [vmem:[%s301 + $0x48] sm:$0xff]
        %v439 = vld [vmem:[%s301 + $0x50] sm:$0xff]
        %v440 = vld [vmem:[%s301 + $0x58] sm:$0xff]
        %v441 = vld [vmem:[%s301 + $0x60] sm:$0xff]
        %v442 = vld [vmem:[%s301 + $0x68] sm:$0xff]
        %v443 = vld [vmem:[%s301 + $0x70] sm:$0xff]
        %v444 = vld [vmem:[%s301 + $0x78] sm:$0xff]
        %v445 = vld [vmem:[%s301 + $0x80] sm:$0xff]
        %v446 = vld [vmem:[%s301 + $0x88] sm:$0xff]
        %v447 = vld [vmem:[%s301 + $0x90] sm:$0xff]
        %v448 = vld [vmem:[%s301 + $0x98] sm:$0xff]
        %v449 = vld [vmem:[%s301 + $0xa0] sm:$0xff]
        %v450 = vld [vmem:[%s301 + $0xa8] sm:$0xff]
        %v451 = vld [vmem:[%s301 + $0xb0] sm:$0xff]
        %v452 = vld [vmem:[%s301 + $0xb8] sm:$0xff]
        %v453 = vld [vmem:[%s301 + $0xc0] sm:$0xff]
        %v454 = vld [vmem:[%s301 + $0xc8] sm:$0xff]
        %v455 = vld [vmem:[%s301 + $0xd0] sm:$0xff]
        %v456 = vld [vmem:[%s301 + $0xd8] sm:$0xff]
        %v457 = vld [vmem:[%s301 + $0xe0] sm:$0xff]
        %v458 = vld [vmem:[%s301 + $0xe8] sm:$0xff]
        %v459 = vld [vmem:[%s301 + $0xf0] sm:$0xff]
        %v460 = vld [vmem:[%s301 + $0xf8] sm:$0xff]
        %v461 = vld [vmem:[%s301 + $0x100] sm:$0xff]
        %v462 = vld [vmem:[%s301 + $0x108] sm:$0xff]
        %v463 = vld [vmem:[%s301 + $0x110] sm:$0xff]
        %v464 = vld [vmem:[%s301 + $0x118] sm:$0xff]
        %v465 = vld [vmem:[%s301 + $0x120] sm:$0xff]
        %v466 = vld [vmem:[%s301 + $0x128] sm:$0xff]
        %v467 = vld [vmem:[%s301 + $0x130] sm:$0xff]
        %v468 = vld [vmem:[%s301 + $0x138] sm:$0xff]
        %v469 = vld [vmem:[%s301 + $0x140] sm:$0xff]
        %v470 = vld [vmem:[%s301 + $0x148] sm:$0xff]
        %v471 = vld [vmem:[%s301 + $0x150] sm:$0xff]
        %v472 = vld [vmem:[%s301 + $0x158] sm:$0xff]
        %v473 = vld [vmem:[%s301 + $0x160] sm:$0xff]
        %v474 = vld [vmem:[%s301 + $0x168] sm:$0xff]
        %v475 = vld [vmem:[%s301 + $0x170] sm:$0xff]
        %v476 = vld [vmem:[%s301 + $0x178] sm:$0xff]
        %v477 = vld [vmem:[%s301 + $0x180] sm:$0xff]
        %v478 = vld [vmem:[%s301 + $0x188] sm:$0xff]
        %v479 = vld [vmem:[%s301 + $0x190] sm:$0xff]
        %v480 = vld [vmem:[%s301 + $0x198] sm:$0xff]
        %v481 = vld [vmem:[%s301 + $0x1a0] sm:$0xff]
        %v482 = vld [vmem:[%s301 + $0x1a8] sm:$0xff]
        %v483 = vld [vmem:[%s301 + $0x1b0] sm:$0xff]
        %v484 = vld [vmem:[%s301 + $0x1b8] sm:$0xff]
        %v485 = vld [vmem:[%s301 + $0x1c0] sm:$0xff]
        %v486 = vld [vmem:[%s301 + $0x1c8] sm:$0xff]
        %v487 = vld [vmem:[%s301 + $0x1d0] sm:$0xff]
        %v488 = vld [vmem:[%s301 + $0x1d8] sm:$0xff]
        %v489 = vld [vmem:[%s301 + $0x1e0] sm:$0xff]
        %v490 = vld [vmem:[%s301 + $0x1e8] sm:$0xff]
        %v491 = vld [vmem:[%s301 + $0x1f0] sm:$0xff]
        %v492 = vld [vmem:[%s301 + $0x1f8] sm:$0xff]
        %v493 = vsel %vm413, 1, 0
        %v494 = vsel %vm414, 1, 0
        %v495 = vsel %vm415, 1, 0
        %v496 = vsel %vm416, 1, 0
        %v497 = vsel %vm417, 1, 0
        %v498 = vsel %vm418, 1, 0
        %v499 = vsel %vm419, 1, 0
        %v500 = vsel %vm420, 1, 0
        %v501 = vsel %vm421, 1, 0
        %v502 = vsel %vm422, 1, 0
        %v503 = vsel %vm423, 1, 0
        %v504 = vsel %vm424, 1, 0
        %v505 = vsel %vm425, 1, 0
        %v506 = vsel %vm426, 1, 0
        %v507 = vsel %vm427, 1, 0
        %v508 = vsel %vm428, 1, 0
        %vm509 = vcmp.eq.s32.totalorder %v493, 1
        %vm510 = vcmp.eq.s32.totalorder %v494, 1
        %vm511 = vcmp.eq.s32.totalorder %v495, 1
        %vm512 = vcmp.eq.s32.totalorder %v496, 1
        %vm513 = vcmp.eq.s32.totalorder %v497, 1
        %vm514 = vcmp.eq.s32.totalorder %v498, 1
        %vm515 = vcmp.eq.s32.totalorder %v499, 1
        %vm516 = vcmp.eq.s32.totalorder %v500, 1
        %vm517 = vcmp.eq.s32.totalorder %v501, 1
        %vm518 = vcmp.eq.s32.totalorder %v502, 1
        %vm519 = vcmp.eq.s32.totalorder %v503, 1
        %vm520 = vcmp.eq.s32.totalorder %v504, 1
        %vm521 = vcmp.eq.s32.totalorder %v505, 1
        %vm522 = vcmp.eq.s32.totalorder %v506, 1
        %vm523 = vcmp.eq.s32.totalorder %v507, 1
        %vm524 = vcmp.eq.s32.totalorder %v508, 1
        %v525 = vsel %vm509, %v429, 0.0
        %v526 = vsel %vm509, %v430, 0.0
        %v527 = vsel %vm509, %v431, 0.0
        %v528 = vsel %vm509, %v432, 0.0
        %v529 = vsel %vm510, %v433, 0.0
        %v530 = vsel %vm510, %v434, 0.0
        %v531 = vsel %vm510, %v435, 0.0
        %v532 = vsel %vm510, %v436, 0.0
        %v533 = vsel %vm511, %v437, 0.0
        %v534 = vsel %vm511, %v438, 0.0
        %v535 = vsel %vm511, %v439, 0.0
        %v536 = vsel %vm511, %v440, 0.0
        %v537 = vsel %vm512, %v441, 0.0
        %v538 = vsel %vm512, %v442, 0.0
        %v539 = vsel %vm512, %v443, 0.0
        %v540 = vsel %vm512, %v444, 0.0
        %v541 = vsel %vm513, %v445, 0.0
        %v542 = vsel %vm513, %v446, 0.0
        %v543 = vsel %vm513, %v447, 0.0
        %v544 = vsel %vm513, %v448, 0.0
        %v545 = vsel %vm514, %v449, 0.0
        %v546 = vsel %vm514, %v450, 0.0
        %v547 = vsel %vm514, %v451, 0.0
        %v548 = vsel %vm514, %v452, 0.0
        %v549 = vsel %vm515, %v453, 0.0
        %v550 = vsel %vm515, %v454, 0.0
        %v551 = vsel %vm515, %v455, 0.0
        %v552 = vsel %vm515, %v456, 0.0
        %v553 = vsel %vm516, %v457, 0.0
        %v554 = vsel %vm516, %v458, 0.0
        %v555 = vsel %vm516, %v459, 0.0
        %v556 = vsel %vm516, %v460, 0.0
        %v557 = vsel %vm517, %v461, 0.0
        %v558 = vsel %vm517, %v462, 0.0
        %v559 = vsel %vm517, %v463, 0.0
        %v560 = vsel %vm517, %v464, 0.0
        %v561 = vsel %vm518, %v465, 0.0
        %v562 = vsel %vm518, %v466, 0.0
        %v563 = vsel %vm518, %v467, 0.0
        %v564 = vsel %vm518, %v468, 0.0
        %v565 = vsel %vm519, %v469, 0.0
        %v566 = vsel %vm519, %v470, 0.0
        %v567 = vsel %vm519, %v471, 0.0
        %v568 = vsel %vm519, %v472, 0.0
        %v569 = vsel %vm520, %v473, 0.0
        %v570 = vsel %vm520, %v474, 0.0
        %v571 = vsel %vm520, %v475, 0.0
        %v572 = vsel %vm520, %v476, 0.0
        %v573 = vsel %vm521, %v477, 0.0
        %v574 = vsel %vm521, %v478, 0.0
        %v575 = vsel %vm521, %v479, 0.0
        %v576 = vsel %vm521, %v480, 0.0
        %v577 = vsel %vm522, %v481, 0.0
        %v578 = vsel %vm522, %v482, 0.0
        %v579 = vsel %vm522, %v483, 0.0
        %v580 = vsel %vm522, %v484, 0.0
        %v581 = vsel %vm523, %v485, 0.0
        %v582 = vsel %vm523, %v486, 0.0
        %v583 = vsel %vm523, %v487, 0.0
        %v584 = vsel %vm523, %v488, 0.0
        %v585 = vsel %vm524, %v489, 0.0
        %v586 = vsel %vm524, %v490, 0.0
        %v587 = vsel %vm524, %v491, 0.0
        %v588 = vsel %vm524, %v492, 0.0
        %v589 = vpack.c.bf16 %v529, %v525
        %v590 = vpack.c.bf16 %v530, %v526
        %v591 = vpack.c.bf16 %v531, %v527
        %v592 = vpack.c.bf16 %v532, %v528
        %v593 = vpack.c.bf16 %v537, %v533
        %v594 = vpack.c.bf16 %v538, %v534
        %v595 = vpack.c.bf16 %v539, %v535
        %v596 = vpack.c.bf16 %v540, %v536
        %v597 = vpack.c.bf16 %v545, %v541
        %v598 = vpack.c.bf16 %v546, %v542
        %v599 = vpack.c.bf16 %v547, %v543
        %v600 = vpack.c.bf16 %v548, %v544
        %v601 = vpack.c.bf16 %v553, %v549
        %v602 = vpack.c.bf16 %v554, %v550
        %v603 = vpack.c.bf16 %v555, %v551
        %v604 = vpack.c.bf16 %v556, %v552
        %v605 = vpack.c.bf16 %v561, %v557
        %v606 = vpack.c.bf16 %v562, %v558
        %v607 = vpack.c.bf16 %v563, %v559
        %v608 = vpack.c.bf16 %v564, %v560
        %v609 = vpack.c.bf16 %v569, %v565
        %v610 = vpack.c.bf16 %v570, %v566
        %v611 = vpack.c.bf16 %v571, %v567
        %v612 = vpack.c.bf16 %v572, %v568
        %v613 = vpack.c.bf16 %v577, %v573
        %v614 = vpack.c.bf16 %v578, %v574
        %v615 = vpack.c.bf16 %v579, %v575
        %v616 = vpack.c.bf16 %v580, %v576
        %v617 = vpack.c.bf16 %v585, %v581
        %v618 = vpack.c.bf16 %v586, %v582
        %v619 = vpack.c.bf16 %v587, %v583
        %v620 = vpack.c.bf16 %v588, %v584
        %v621 = vld [vmem:[#allocation8] sm:$0xff]
        %v622 = vld [vmem:[#allocation8 + $0x8] sm:$0xff]
        %v623 = vld [vmem:[#allocation8 + $0x10] sm:$0xff]
        %v624 = vld [vmem:[#allocation8 + $0x18] sm:$0xff]
        %v625 = vld [vmem:[#allocation8 + $0x20] sm:$0xff]
        %v626 = vld [vmem:[#allocation8 + $0x28] sm:$0xff]
        %v627 = vld [vmem:[#allocation8 + $0x30] sm:$0xff]
        %v628 = vld [vmem:[#allocation8 + $0x38] sm:$0xff]
        %v629 = vld [vmem:[#allocation8 + $0x40] sm:$0xff]
        %v630 = vld [vmem:[#allocation8 + $0x48] sm:$0xff]
        %v631 = vld [vmem:[#allocation8 + $0x50] sm:$0xff]
        %v632 = vld [vmem:[#allocation8 + $0x58] sm:$0xff]
        %v633 = vld [vmem:[#allocation8 + $0x60] sm:$0xff]
        %v634 = vld [vmem:[#allocation8 + $0x68] sm:$0xff]
        %v635 = vld [vmem:[#allocation8 + $0x70] sm:$0xff]
        %v636 = vld [vmem:[#allocation8 + $0x78] sm:$0xff]
        %v637 = vld [vmem:[#allocation8 + $0x80] sm:$0xff]
        %v638 = vld [vmem:[#allocation8 + $0x88] sm:$0xff]
        %v639 = vld [vmem:[#allocation8 + $0x90] sm:$0xff]
        %v640 = vld [vmem:[#allocation8 + $0x98] sm:$0xff]
        %v641 = vld [vmem:[#allocation8 + $0xa0] sm:$0xff]
        %v642 = vld [vmem:[#allocation8 + $0xa8] sm:$0xff]
        %v643 = vld [vmem:[#allocation8 + $0xb0] sm:$0xff]
        %v644 = vld [vmem:[#allocation8 + $0xb8] sm:$0xff]
        %v645 = vld [vmem:[#allocation8 + $0xc0] sm:$0xff]
        %v646 = vld [vmem:[#allocation8 + $0xc8] sm:$0xff]
        %v647 = vld [vmem:[#allocation8 + $0xd0] sm:$0xff]
        %v648 = vld [vmem:[#allocation8 + $0xd8] sm:$0xff]
        %v649 = vld [vmem:[#allocation8 + $0xe0] sm:$0xff]
        %v650 = vld [vmem:[#allocation8 + $0xe8] sm:$0xff]
        %v651 = vld [vmem:[#allocation8 + $0xf0] sm:$0xff]
        %v652 = vld [vmem:[#allocation8 + $0xf8] sm:$0xff]
        %v653 = vld [vmem:[#allocation8 + $0x100] sm:$0xff]
        %v654 = vld [vmem:[#allocation8 + $0x108] sm:$0xff]
        %v655 = vld [vmem:[#allocation8 + $0x110] sm:$0xff]
        %v656 = vld [vmem:[#allocation8 + $0x118] sm:$0xff]
        %v657 = vld [vmem:[#allocation8 + $0x120] sm:$0xff]
        %v658 = vld [vmem:[#allocation8 + $0x128] sm:$0xff]
        %v659 = vld [vmem:[#allocation8 + $0x130] sm:$0xff]
        %v660 = vld [vmem:[#allocation8 + $0x138] sm:$0xff]
        %v661 = vld [vmem:[#allocation8 + $0x140] sm:$0xff]
        %v662 = vld [vmem:[#allocation8 + $0x148] sm:$0xff]
        %v663 = vld [vmem:[#allocation8 + $0x150] sm:$0xff]
        %v664 = vld [vmem:[#allocation8 + $0x158] sm:$0xff]
        %v665 = vld [vmem:[#allocation8 + $0x160] sm:$0xff]
        %v666 = vld [vmem:[#allocation8 + $0x168] sm:$0xff]
        %v667 = vld [vmem:[#allocation8 + $0x170] sm:$0xff]
        %v668 = vld [vmem:[#allocation8 + $0x178] sm:$0xff]
        %v669 = vld [vmem:[#allocation8 + $0x180] sm:$0xff]
        %v670 = vld [vmem:[#allocation8 + $0x188] sm:$0xff]
        %v671 = vld [vmem:[#allocation8 + $0x190] sm:$0xff]
        %v672 = vld [vmem:[#allocation8 + $0x198] sm:$0xff]
        %v673 = vld [vmem:[#allocation8 + $0x1a0] sm:$0xff]
        %v674 = vld [vmem:[#allocation8 + $0x1a8] sm:$0xff]
        %v675 = vld [vmem:[#allocation8 + $0x1b0] sm:$0xff]
        %v676 = vld [vmem:[#allocation8 + $0x1b8] sm:$0xff]
        %v677 = vld [vmem:[#allocation8 + $0x1c0] sm:$0xff]
        %v678 = vld [vmem:[#allocation8 + $0x1c8] sm:$0xff]
        %v679 = vld [vmem:[#allocation8 + $0x1d0] sm:$0xff]
        %v680 = vld [vmem:[#allocation8 + $0x1d8] sm:$0xff]
        %v681 = vld [vmem:[#allocation8 + $0x1e0] sm:$0xff]
        %v682 = vld [vmem:[#allocation8 + $0x1e8] sm:$0xff]
        %v683 = vld [vmem:[#allocation8 + $0x1f0] sm:$0xff]
        %v684 = vld [vmem:[#allocation8 + $0x1f8] sm:$0xff]
        %v749 = vunpack.c.l.b16 %v621
        %v750 = vunpack.c.h.b16 %v621
        %v751 = vunpack.c.l.b16 %v622
        %v752 = vunpack.c.h.b16 %v622
        %v753 = vunpack.c.l.b16 %v623
        %v754 = vunpack.c.h.b16 %v623
        %v755 = vunpack.c.l.b16 %v624
        %v756 = vunpack.c.h.b16 %v624
        %v757 = vunpack.c.l.b16 %v625
        %v758 = vunpack.c.h.b16 %v625
        %v759 = vunpack.c.l.b16 %v626
        %v760 = vunpack.c.h.b16 %v626
        %v761 = vunpack.c.l.b16 %v627
        %v762 = vunpack.c.h.b16 %v627
        %v763 = vunpack.c.l.b16 %v628
        %v764 = vunpack.c.h.b16 %v628
        %v765 = vunpack.c.l.b16 %v629
        %v766 = vunpack.c.h.b16 %v629
        %v767 = vunpack.c.l.b16 %v630
        %v768 = vunpack.c.h.b16 %v630
        %v769 = vunpack.c.l.b16 %v631
        %v770 = vunpack.c.h.b16 %v631
        %v771 = vunpack.c.l.b16 %v632
        %v772 = vunpack.c.h.b16 %v632
        %v773 = vunpack.c.l.b16 %v633
        %v774 = vunpack.c.h.b16 %v633
        %v775 = vunpack.c.l.b16 %v634
        %v776 = vunpack.c.h.b16 %v634
        %v777 = vunpack.c.l.b16 %v635
        %v778 = vunpack.c.h.b16 %v635
        %v779 = vunpack.c.l.b16 %v636
        %v780 = vunpack.c.h.b16 %v636
        %v781 = vunpack.c.l.b16 %v637
        %v782 = vunpack.c.h.b16 %v637
        %v783 = vunpack.c.l.b16 %v638
        %v784 = vunpack.c.h.b16 %v638
        %v785 = vunpack.c.l.b16 %v639
        %v786 = vunpack.c.h.b16 %v639
        %v787 = vunpack.c.l.b16 %v640
        %v788 = vunpack.c.h.b16 %v640
        %v789 = vunpack.c.l.b16 %v641
        %v790 = vunpack.c.h.b16 %v641
        %v791 = vunpack.c.l.b16 %v642
        %v792 = vunpack.c.h.b16 %v642
        %v793 = vunpack.c.l.b16 %v643
        %v794 = vunpack.c.h.b16 %v643
        %v795 = vunpack.c.l.b16 %v644
        %v796 = vunpack.c.h.b16 %v644
        %v797 = vunpack.c.l.b16 %v645
        %v798 = vunpack.c.h.b16 %v645
        %v799 = vunpack.c.l.b16 %v646
        %v800 = vunpack.c.h.b16 %v646
        %v801 = vunpack.c.l.b16 %v647
        %v802 = vunpack.c.h.b16 %v647
        %v803 = vunpack.c.l.b16 %v648
        %v804 = vunpack.c.h.b16 %v648
        %v805 = vunpack.c.l.b16 %v649
        %v806 = vunpack.c.h.b16 %v649
        %v807 = vunpack.c.l.b16 %v650
        %v808 = vunpack.c.h.b16 %v650
        %v809 = vunpack.c.l.b16 %v651
        %v810 = vunpack.c.h.b16 %v651
        %v811 = vunpack.c.l.b16 %v652
        %v812 = vunpack.c.h.b16 %v652
        %v813 = vunpack.c.l.b16 %v653
        %v814 = vunpack.c.h.b16 %v653
        %v815 = vunpack.c.l.b16 %v654
        %v816 = vunpack.c.h.b16 %v654
        %v817 = vunpack.c.l.b16 %v655
        %v818 = vunpack.c.h.b16 %v655
        %v819 = vunpack.c.l.b16 %v656
        %v820 = vunpack.c.h.b16 %v656
        %v821 = vunpack.c.l.b16 %v657
        %v822 = vunpack.c.h.b16 %v657
        %v823 = vunpack.c.l.b16 %v658
        %v824 = vunpack.c.h.b16 %v658
        %v825 = vunpack.c.l.b16 %v659
        %v826 = vunpack.c.h.b16 %v659
        %v827 = vunpack.c.l.b16 %v660
        %v828 = vunpack.c.h.b16 %v660
        %v829 = vunpack.c.l.b16 %v661
        %v830 = vunpack.c.h.b16 %v661
        %v831 = vunpack.c.l.b16 %v662
        %v832 = vunpack.c.h.b16 %v662
        %v833 = vunpack.c.l.b16 %v663
        %v834 = vunpack.c.h.b16 %v663
        %v835 = vunpack.c.l.b16 %v664
        %v836 = vunpack.c.h.b16 %v664
        %v837 = vunpack.c.l.b16 %v665
        %v838 = vunpack.c.h.b16 %v665
        %v839 = vunpack.c.l.b16 %v666
        %v840 = vunpack.c.h.b16 %v666
        %v841 = vunpack.c.l.b16 %v667
        %v842 = vunpack.c.h.b16 %v667
        %v843 = vunpack.c.l.b16 %v668
        %v844 = vunpack.c.h.b16 %v668
        %v845 = vunpack.c.l.b16 %v669
        %v846 = vunpack.c.h.b16 %v669
        %v847 = vunpack.c.l.b16 %v670
        %v848 = vunpack.c.h.b16 %v670
        %v849 = vunpack.c.l.b16 %v671
        %v850 = vunpack.c.h.b16 %v671
        %v851 = vunpack.c.l.b16 %v672
        %v852 = vunpack.c.h.b16 %v672
        %v853 = vunpack.c.l.b16 %v673
        %v854 = vunpack.c.h.b16 %v673
        %v855 = vunpack.c.l.b16 %v674
        %v856 = vunpack.c.h.b16 %v674
        %v857 = vunpack.c.l.b16 %v675
        %v858 = vunpack.c.h.b16 %v675
        %v859 = vunpack.c.l.b16 %v676
        %v860 = vunpack.c.h.b16 %v676
        %v861 = vunpack.c.l.b16 %v677
        %v862 = vunpack.c.h.b16 %v677
        %v863 = vunpack.c.l.b16 %v678
        %v864 = vunpack.c.h.b16 %v678
        %v865 = vunpack.c.l.b16 %v679
        %v866 = vunpack.c.h.b16 %v679
        %v867 = vunpack.c.l.b16 %v680
        %v868 = vunpack.c.h.b16 %v680
        %v869 = vunpack.c.l.b16 %v681
        %v870 = vunpack.c.h.b16 %v681
        %v871 = vunpack.c.l.b16 %v682
        %v872 = vunpack.c.h.b16 %v682
        %v873 = vunpack.c.l.b16 %v683
        %v874 = vunpack.c.h.b16 %v683
        %v875 = vunpack.c.l.b16 %v684
        %v876 = vunpack.c.h.b16 %v684
        %v877 = vpack.c.b16 %v751, %v749
        %v878 = vpack.c.b16 %v752, %v750
        %v879 = vpack.c.b16 %v755, %v753
        %v880 = vpack.c.b16 %v756, %v754
        %v881 = vpack.c.b16 %v759, %v757
        %v882 = vpack.c.b16 %v760, %v758
        %v883 = vpack.c.b16 %v763, %v761
        %v884 = vpack.c.b16 %v764, %v762
        %v885 = vpack.c.b16 %v767, %v765
        %v886 = vpack.c.b16 %v768, %v766
        %v887 = vpack.c.b16 %v771, %v769
        %v888 = vpack.c.b16 %v772, %v770
        %v889 = vpack.c.b16 %v775, %v773
        %v890 = vpack.c.b16 %v776, %v774
        %v891 = vpack.c.b16 %v779, %v777
        %v892 = vpack.c.b16 %v780, %v778
        %v893 = vpack.c.b16 %v783, %v781
        %v894 = vpack.c.b16 %v784, %v782
        %v895 = vpack.c.b16 %v787, %v785
        %v896 = vpack.c.b16 %v788, %v786
        %v897 = vpack.c.b16 %v791, %v789
        %v898 = vpack.c.b16 %v792, %v790
        %v899 = vpack.c.b16 %v795, %v793
        %v900 = vpack.c.b16 %v796, %v794
        %v901 = vpack.c.b16 %v799, %v797
        %v902 = vpack.c.b16 %v800, %v798
        %v903 = vpack.c.b16 %v803, %v801
        %v904 = vpack.c.b16 %v804, %v802
        %v905 = vpack.c.b16 %v807, %v805
        %v906 = vpack.c.b16 %v808, %v806
        %v907 = vpack.c.b16 %v811, %v809
        %v908 = vpack.c.b16 %v812, %v810
        %v909 = vpack.c.b16 %v815, %v813
        %v910 = vpack.c.b16 %v816, %v814
        %v911 = vpack.c.b16 %v819, %v817
        %v912 = vpack.c.b16 %v820, %v818
        %v913 = vpack.c.b16 %v823, %v821
        %v914 = vpack.c.b16 %v824, %v822
        %v915 = vpack.c.b16 %v827, %v825
        %v916 = vpack.c.b16 %v828, %v826
        %v917 = vpack.c.b16 %v831, %v829
        %v918 = vpack.c.b16 %v832, %v830
        %v919 = vpack.c.b16 %v835, %v833
        %v920 = vpack.c.b16 %v836, %v834
        %v921 = vpack.c.b16 %v839, %v837
        %v922 = vpack.c.b16 %v840, %v838
        %v923 = vpack.c.b16 %v843, %v841
        %v924 = vpack.c.b16 %v844, %v842
        %v925 = vpack.c.b16 %v847, %v845
        %v926 = vpack.c.b16 %v848, %v846
        %v927 = vpack.c.b16 %v851, %v849
        %v928 = vpack.c.b16 %v852, %v850
        %v929 = vpack.c.b16 %v855, %v853
        %v930 = vpack.c.b16 %v856, %v854
        %v931 = vpack.c.b16 %v859, %v857
        %v932 = vpack.c.b16 %v860, %v858
        %v933 = vpack.c.b16 %v863, %v861
        %v934 = vpack.c.b16 %v864, %v862
        %v935 = vpack.c.b16 %v867, %v865
        %v936 = vpack.c.b16 %v868, %v866
        %v937 = vpack.c.b16 %v871, %v869
        %v938 = vpack.c.b16 %v872, %v870
        %v939 = vpack.c.b16 %v875, %v873
        %v940 = vpack.c.b16 %v876, %v874
        %1005 = vmatpush.bf16.msra.mxu0 %v891
        %1006 = vmatpush.bf16.msra.mxu0 %v889
        %1007 = vmatpush.bf16.msra.mxu0 %v887
        %1008 = vmatpush.bf16.msra.mxu0 %v885
        %1009 = vmatpush.bf16.msra.mxu0 %v883
        %1010 = vmatpush.bf16.msra.mxu0 %v881
        %1011 = vmatpush.bf16.msra.mxu0 %v879
        %1012 = vmatpush.bf16.msra.mxu0 %v877
        %1013 = vmatmul.bf16.gmra.mxu0 %v589
        %v1014 = vpop.f32.mrf.mxu0
        %v1015 = vadd.f32 0.0, %v1014
        %v1016 = vpop.f32.mrf.mxu0
        %v1017 = vadd.f32 0.0, %v1016
        %1018 = vmatmul.bf16.gmra.mxu0 %v593
        %v1019 = vpop.f32.mrf.mxu0
        %v1020 = vadd.f32 0.0, %v1019
        %v1021 = vpop.f32.mrf.mxu0
        %v1022 = vadd.f32 0.0, %v1021
        %1023 = vmatmul.bf16.gmra.mxu0 %v597
        %v1024 = vpop.f32.mrf.mxu0
        %v1025 = vadd.f32 0.0, %v1024
        %v1026 = vpop.f32.mrf.mxu0
        %v1027 = vadd.f32 0.0, %v1026
        %1028 = vmatmul.bf16.gmra.mxu0 %v601
        %v1029 = vpop.f32.mrf.mxu0
        %v1030 = vadd.f32 0.0, %v1029
        %v1031 = vpop.f32.mrf.mxu0
        %v1032 = vadd.f32 0.0, %v1031
        %1033 = vmatmul.bf16.gmra.mxu0 %v605
        %v1034 = vpop.f32.mrf.mxu0
        %v1035 = vadd.f32 0.0, %v1034
        %v1036 = vpop.f32.mrf.mxu0
        %v1037 = vadd.f32 0.0, %v1036
        %1038 = vmatmul.bf16.gmra.mxu0 %v609
        %v1039 = vpop.f32.mrf.mxu0
        %v1040 = vadd.f32 0.0, %v1039
        %v1041 = vpop.f32.mrf.mxu0
        %v1042 = vadd.f32 0.0, %v1041
        %1043 = vmatmul.bf16.gmra.mxu0 %v613
        %v1044 = vpop.f32.mrf.mxu0
        %v1045 = vadd.f32 0.0, %v1044
        %v1046 = vpop.f32.mrf.mxu0
        %v1047 = vadd.f32 0.0, %v1046
        %1048 = vmatmul.bf16.gmra.mxu0 %v617
        %v1049 = vpop.f32.mrf.mxu0
        %v1050 = vadd.f32 0.0, %v1049
        %v1051 = vpop.f32.mrf.mxu0
        %v1052 = vadd.f32 0.0, %v1051
        %1053 = vdwg.mxu0
        %1054 = vmatpush.bf16.msra.mxu0 %v907
        %1055 = vmatpush.bf16.msra.mxu0 %v905
        %1056 = vmatpush.bf16.msra.mxu0 %v903
        %1057 = vmatpush.bf16.msra.mxu0 %v901
        %1058 = vmatpush.bf16.msra.mxu0 %v899
        %1059 = vmatpush.bf16.msra.mxu0 %v897
        %1060 = vmatpush.bf16.msra.mxu0 %v895
        %1061 = vmatpush.bf16.msra.mxu0 %v893
        %1062 = vmatmul.bf16.gmra.mxu0 %v590
        %v1063 = vpop.f32.mrf.mxu0
        %v1064 = vadd.f32 %v1015, %v1063
        %v1065 = vpop.f32.mrf.mxu0
        %v1066 = vadd.f32 %v1017, %v1065
        %1067 = vmatmul.bf16.gmra.mxu0 %v594
        %v1068 = vpop.f32.mrf.mxu0
        %v1069 = vadd.f32 %v1020, %v1068
        %v1070 = vpop.f32.mrf.mxu0
        %v1071 = vadd.f32 %v1022, %v1070
        %1072 = vmatmul.bf16.gmra.mxu0 %v598
        %v1073 = vpop.f32.mrf.mxu0
        %v1074 = vadd.f32 %v1025, %v1073
        %v1075 = vpop.f32.mrf.mxu0
        %v1076 = vadd.f32 %v1027, %v1075
        %1077 = vmatmul.bf16.gmra.mxu0 %v602
        %v1078 = vpop.f32.mrf.mxu0
        %v1079 = vadd.f32 %v1030, %v1078
        %v1080 = vpop.f32.mrf.mxu0
        %v1081 = vadd.f32 %v1032, %v1080
        %1082 = vmatmul.bf16.gmra.mxu0 %v606
        %v1083 = vpop.f32.mrf.mxu0
        %v1084 = vadd.f32 %v1035, %v1083
        %v1085 = vpop.f32.mrf.mxu0
        %v1086 = vadd.f32 %v1037, %v1085
        %1087 = vmatmul.bf16.gmra.mxu0 %v610
        %v1088 = vpop.f32.mrf.mxu0
        %v1089 = vadd.f32 %v1040, %v1088
        %v1090 = vpop.f32.mrf.mxu0
        %v1091 = vadd.f32 %v1042, %v1090
        %1092 = vmatmul.bf16.gmra.mxu0 %v614
        %v1093 = vpop.f32.mrf.mxu0
        %v1094 = vadd.f32 %v1045, %v1093
        %v1095 = vpop.f32.mrf.mxu0
        %v1096 = vadd.f32 %v1047, %v1095
        %1097 = vmatmul.bf16.gmra.mxu0 %v618
        %v1098 = vpop.f32.mrf.mxu0
        %v1099 = vadd.f32 %v1050, %v1098
        %v1100 = vpop.f32.mrf.mxu0
        %v1101 = vadd.f32 %v1052, %v1100
        %1102 = vdwg.mxu0
        %1103 = vmatpush.bf16.msra.mxu0 %v923
        %1104 = vmatpush.bf16.msra.mxu0 %v921
        %1105 = vmatpush.bf16.msra.mxu0 %v919
        %1106 = vmatpush.bf16.msra.mxu0 %v917
        %1107 = vmatpush.bf16.msra.mxu0 %v915
        %1108 = vmatpush.bf16.msra.mxu0 %v913
        %1109 = vmatpush.bf16.msra.mxu0 %v911
        %1110 = vmatpush.bf16.msra.mxu0 %v909
        %1111 = vmatmul.bf16.gmra.mxu0 %v591
        %v1112 = vpop.f32.mrf.mxu0
        %v1113 = vadd.f32 %v1064, %v1112
        %v1114 = vpop.f32.mrf.mxu0
        %v1115 = vadd.f32 %v1066, %v1114
        %1116 = vmatmul.bf16.gmra.mxu0 %v595
        %v1117 = vpop.f32.mrf.mxu0
        %v1118 = vadd.f32 %v1069, %v1117
        %v1119 = vpop.f32.mrf.mxu0
        %v1120 = vadd.f32 %v1071, %v1119
        %1121 = vmatmul.bf16.gmra.mxu0 %v599
        %v1122 = vpop.f32.mrf.mxu0
        %v1123 = vadd.f32 %v1074, %v1122
        %v1124 = vpop.f32.mrf.mxu0
        %v1125 = vadd.f32 %v1076, %v1124
        %1126 = vmatmul.bf16.gmra.mxu0 %v603
        %v1127 = vpop.f32.mrf.mxu0
        %v1128 = vadd.f32 %v1079, %v1127
        %v1129 = vpop.f32.mrf.mxu0
        %v1130 = vadd.f32 %v1081, %v1129
        %1131 = vmatmul.bf16.gmra.mxu0 %v607
        %v1132 = vpop.f32.mrf.mxu0
        %v1133 = vadd.f32 %v1084, %v1132
        %v1134 = vpop.f32.mrf.mxu0
        %v1135 = vadd.f32 %v1086, %v1134
        %1136 = vmatmul.bf16.gmra.mxu0 %v611
        %v1137 = vpop.f32.mrf.mxu0
        %v1138 = vadd.f32 %v1089, %v1137
        %v1139 = vpop.f32.mrf.mxu0
        %v1140 = vadd.f32 %v1091, %v1139
        %1141 = vmatmul.bf16.gmra.mxu0 %v615
        %v1142 = vpop.f32.mrf.mxu0
        %v1143 = vadd.f32 %v1094, %v1142
        %v1144 = vpop.f32.mrf.mxu0
        %v1145 = vadd.f32 %v1096, %v1144
        %1146 = vmatmul.bf16.gmra.mxu0 %v619
        %v1147 = vpop.f32.mrf.mxu0
        %v1148 = vadd.f32 %v1099, %v1147
        %v1149 = vpop.f32.mrf.mxu0
        %v1150 = vadd.f32 %v1101, %v1149
        %1151 = vdwg.mxu0
        %1152 = vmatpush.bf16.msra.mxu0 %v939
        %1153 = vmatpush.bf16.msra.mxu0 %v937
        %1154 = vmatpush.bf16.msra.mxu0 %v935
        %1155 = vmatpush.bf16.msra.mxu0 %v933
        %1156 = vmatpush.bf16.msra.mxu0 %v931
        %1157 = vmatpush.bf16.msra.mxu0 %v929
        %1158 = vmatpush.bf16.msra.mxu0 %v927
        %1159 = vmatpush.bf16.msra.mxu0 %v925
        %1160 = vmatmul.bf16.gmra.mxu0 %v592
        %v1161 = vpop.f32.mrf.mxu0
        %v1162 = vadd.f32 %v1113, %v1161
        %v1163 = vpop.f32.mrf.mxu0
        %v1164 = vadd.f32 %v1115, %v1163
        %1165 = vmatmul.bf16.gmra.mxu0 %v596
        %v1166 = vpop.f32.mrf.mxu0
        %v1167 = vadd.f32 %v1118, %v1166
        %v1168 = vpop.f32.mrf.mxu0
        %v1169 = vadd.f32 %v1120, %v1168
        %1170 = vmatmul.bf16.gmra.mxu0 %v600
        %v1171 = vpop.f32.mrf.mxu0
        %v1172 = vadd.f32 %v1123, %v1171
        %v1173 = vpop.f32.mrf.mxu0
        %v1174 = vadd.f32 %v1125, %v1173
        %1175 = vmatmul.bf16.gmra.mxu0 %v604
        %v1176 = vpop.f32.mrf.mxu0
        %v1177 = vadd.f32 %v1128, %v1176
        %v1178 = vpop.f32.mrf.mxu0
        %v1179 = vadd.f32 %v1130, %v1178
        %1180 = vmatmul.bf16.gmra.mxu0 %v608
        %v1181 = vpop.f32.mrf.mxu0
        %v1182 = vadd.f32 %v1133, %v1181
        %v1183 = vpop.f32.mrf.mxu0
        %v1184 = vadd.f32 %v1135, %v1183
        %1185 = vmatmul.bf16.gmra.mxu0 %v612
        %v1186 = vpop.f32.mrf.mxu0
        %v1187 = vadd.f32 %v1138, %v1186
        %v1188 = vpop.f32.mrf.mxu0
        %v1189 = vadd.f32 %v1140, %v1188
        %1190 = vmatmul.bf16.gmra.mxu0 %v616
        %v1191 = vpop.f32.mrf.mxu0
        %v1192 = vadd.f32 %v1143, %v1191
        %v1193 = vpop.f32.mrf.mxu0
        %v1194 = vadd.f32 %v1145, %v1193
        %1195 = vmatmul.bf16.gmra.mxu0 %v620
        %v1196 = vpop.f32.mrf.mxu0
        %v1197 = vadd.f32 %v1148, %v1196
        %v1198 = vpop.f32.mrf.mxu0
        %v1199 = vadd.f32 %v1150, %v1198
        %1200 = vdwg.mxu0
        %1201 = vmatpush.bf16.msra.mxu0 %v892
        %1202 = vmatpush.bf16.msra.mxu0 %v890
        %1203 = vmatpush.bf16.msra.mxu0 %v888
        %1204 = vmatpush.bf16.msra.mxu0 %v886
        %1205 = vmatpush.bf16.msra.mxu0 %v884
        %1206 = vmatpush.bf16.msra.mxu0 %v882
        %1207 = vmatpush.bf16.msra.mxu0 %v880
        %1208 = vmatpush.bf16.msra.mxu0 %v878
        %1209 = vmatmul.bf16.gmra.mxu0 %v589
        %v1210 = vpop.f32.mrf.mxu0
        %v1211 = vadd.f32 0.0, %v1210
        %v1212 = vpop.f32.mrf.mxu0
        %v1213 = vadd.f32 0.0, %v1212
        %1214 = vmatmul.bf16.gmra.mxu0 %v593
        %v1215 = vpop.f32.mrf.mxu0
        %v1216 = vadd.f32 0.0, %v1215
        %v1217 = vpop.f32.mrf.mxu0
        %v1218 = vadd.f32 0.0, %v1217
        %1219 = vmatmul.bf16.gmra.mxu0 %v597
        %v1220 = vpop.f32.mrf.mxu0
        %v1221 = vadd.f32 0.0, %v1220
        %v1222 = vpop.f32.mrf.mxu0
        %v1223 = vadd.f32 0.0, %v1222
        %1224 = vmatmul.bf16.gmra.mxu0 %v601
        %v1225 = vpop.f32.mrf.mxu0
        %v1226 = vadd.f32 0.0, %v1225
        %v1227 = vpop.f32.mrf.mxu0
        %v1228 = vadd.f32 0.0, %v1227
        %1229 = vmatmul.bf16.gmra.mxu0 %v605
        %v1230 = vpop.f32.mrf.mxu0
        %v1231 = vadd.f32 0.0, %v1230
        %v1232 = vpop.f32.mrf.mxu0
        %v1233 = vadd.f32 0.0, %v1232
        %1234 = vmatmul.bf16.gmra.mxu0 %v609
        %v1235 = vpop.f32.mrf.mxu0
        %v1236 = vadd.f32 0.0, %v1235
        %v1237 = vpop.f32.mrf.mxu0
        %v1238 = vadd.f32 0.0, %v1237
        %1239 = vmatmul.bf16.gmra.mxu0 %v613
        %v1240 = vpop.f32.mrf.mxu0
        %v1241 = vadd.f32 0.0, %v1240
        %v1242 = vpop.f32.mrf.mxu0
        %v1243 = vadd.f32 0.0, %v1242
        %1244 = vmatmul.bf16.gmra.mxu0 %v617
        %v1245 = vpop.f32.mrf.mxu0
        %v1246 = vadd.f32 0.0, %v1245
        %v1247 = vpop.f32.mrf.mxu0
        %v1248 = vadd.f32 0.0, %v1247
        %1249 = vdwg.mxu0
        %1250 = vmatpush.bf16.msra.mxu0 %v908
        %1251 = vmatpush.bf16.msra.mxu0 %v906
        %1252 = vmatpush.bf16.msra.mxu0 %v904
        %1253 = vmatpush.bf16.msra.mxu0 %v902
        %1254 = vmatpush.bf16.msra.mxu0 %v900
        %1255 = vmatpush.bf16.msra.mxu0 %v898
        %1256 = vmatpush.bf16.msra.mxu0 %v896
        %1257 = vmatpush.bf16.msra.mxu0 %v894
        %1258 = vmatmul.bf16.gmra.mxu0 %v590
        %v1259 = vpop.f32.mrf.mxu0
        %v1260 = vadd.f32 %v1211, %v1259
        %v1261 = vpop.f32.mrf.mxu0
        %v1262 = vadd.f32 %v1213, %v1261
        %1263 = vmatmul.bf16.gmra.mxu0 %v594
        %v1264 = vpop.f32.mrf.mxu0
        %v1265 = vadd.f32 %v1216, %v1264
        %v1266 = vpop.f32.mrf.mxu0
        %v1267 = vadd.f32 %v1218, %v1266
        %1268 = vmatmul.bf16.gmra.mxu0 %v598
        %v1269 = vpop.f32.mrf.mxu0
        %v1270 = vadd.f32 %v1221, %v1269
        %v1271 = vpop.f32.mrf.mxu0
        %v1272 = vadd.f32 %v1223, %v1271
        %1273 = vmatmul.bf16.gmra.mxu0 %v602
        %v1274 = vpop.f32.mrf.mxu0
        %v1275 = vadd.f32 %v1226, %v1274
        %v1276 = vpop.f32.mrf.mxu0
        %v1277 = vadd.f32 %v1228, %v1276
        %1278 = vmatmul.bf16.gmra.mxu0 %v606
        %v1279 = vpop.f32.mrf.mxu0
        %v1280 = vadd.f32 %v1231, %v1279
        %v1281 = vpop.f32.mrf.mxu0
        %v1282 = vadd.f32 %v1233, %v1281
        %1283 = vmatmul.bf16.gmra.mxu0 %v610
        %v1284 = vpop.f32.mrf.mxu0
        %v1285 = vadd.f32 %v1236, %v1284
        %v1286 = vpop.f32.mrf.mxu0
        %v1287 = vadd.f32 %v1238, %v1286
        %1288 = vmatmul.bf16.gmra.mxu0 %v614
        %v1289 = vpop.f32.mrf.mxu0
        %v1290 = vadd.f32 %v1241, %v1289
        %v1291 = vpop.f32.mrf.mxu0
        %v1292 = vadd.f32 %v1243, %v1291
        %1293 = vmatmul.bf16.gmra.mxu0 %v618
        %v1294 = vpop.f32.mrf.mxu0
        %v1295 = vadd.f32 %v1246, %v1294
        %v1296 = vpop.f32.mrf.mxu0
        %v1297 = vadd.f32 %v1248, %v1296
        %1298 = vdwg.mxu0
        %1299 = vmatpush.bf16.msra.mxu0 %v924
        %1300 = vmatpush.bf16.msra.mxu0 %v922
        %1301 = vmatpush.bf16.msra.mxu0 %v920
        %1302 = vmatpush.bf16.msra.mxu0 %v918
        %1303 = vmatpush.bf16.msra.mxu0 %v916
        %1304 = vmatpush.bf16.msra.mxu0 %v914
        %1305 = vmatpush.bf16.msra.mxu0 %v912
        %1306 = vmatpush.bf16.msra.mxu0 %v910
        %1307 = vmatmul.bf16.gmra.mxu0 %v591
        %v1308 = vpop.f32.mrf.mxu0
        %v1309 = vadd.f32 %v1260, %v1308
        %v1310 = vpop.f32.mrf.mxu0
        %v1311 = vadd.f32 %v1262, %v1310
        %1312 = vmatmul.bf16.gmra.mxu0 %v595
        %v1313 = vpop.f32.mrf.mxu0
        %v1314 = vadd.f32 %v1265, %v1313
        %v1315 = vpop.f32.mrf.mxu0
        %v1316 = vadd.f32 %v1267, %v1315
        %1317 = vmatmul.bf16.gmra.mxu0 %v599
        %v1318 = vpop.f32.mrf.mxu0
        %v1319 = vadd.f32 %v1270, %v1318
        %v1320 = vpop.f32.mrf.mxu0
        %v1321 = vadd.f32 %v1272, %v1320
        %1322 = vmatmul.bf16.gmra.mxu0 %v603
        %v1323 = vpop.f32.mrf.mxu0
        %v1324 = vadd.f32 %v1275, %v1323
        %v1325 = vpop.f32.mrf.mxu0
        %v1326 = vadd.f32 %v1277, %v1325
        %1327 = vmatmul.bf16.gmra.mxu0 %v607
        %v1328 = vpop.f32.mrf.mxu0
        %v1329 = vadd.f32 %v1280, %v1328
        %v1330 = vpop.f32.mrf.mxu0
        %v1331 = vadd.f32 %v1282, %v1330
        %1332 = vmatmul.bf16.gmra.mxu0 %v611
        %v1333 = vpop.f32.mrf.mxu0
        %v1334 = vadd.f32 %v1285, %v1333
        %v1335 = vpop.f32.mrf.mxu0
        %v1336 = vadd.f32 %v1287, %v1335
        %1337 = vmatmul.bf16.gmra.mxu0 %v615
        %v1338 = vpop.f32.mrf.mxu0
        %v1339 = vadd.f32 %v1290, %v1338
        %v1340 = vpop.f32.mrf.mxu0
        %v1341 = vadd.f32 %v1292, %v1340
        %1342 = vmatmul.bf16.gmra.mxu0 %v619
        %v1343 = vpop.f32.mrf.mxu0
        %v1344 = vadd.f32 %v1295, %v1343
        %v1345 = vpop.f32.mrf.mxu0
        %v1346 = vadd.f32 %v1297, %v1345
        %1347 = vdwg.mxu0
        %1348 = vmatpush.bf16.msra.mxu0 %v940
        %1349 = vmatpush.bf16.msra.mxu0 %v938
        %1350 = vmatpush.bf16.msra.mxu0 %v936
        %1351 = vmatpush.bf16.msra.mxu0 %v934
        %1352 = vmatpush.bf16.msra.mxu0 %v932
        %1353 = vmatpush.bf16.msra.mxu0 %v930
        %1354 = vmatpush.bf16.msra.mxu0 %v928
        %1355 = vmatpush.bf16.msra.mxu0 %v926
        %1356 = vmatmul.bf16.gmra.mxu0 %v592
        %v1357 = vpop.f32.mrf.mxu0
        %v1358 = vadd.f32 %v1309, %v1357
        %v1359 = vpop.f32.mrf.mxu0
        %v1360 = vadd.f32 %v1311, %v1359
        %1361 = vmatmul.bf16.gmra.mxu0 %v596
        %v1362 = vpop.f32.mrf.mxu0
        %v1363 = vadd.f32 %v1314, %v1362
        %v1364 = vpop.f32.mrf.mxu0
        %v1365 = vadd.f32 %v1316, %v1364
        %1366 = vmatmul.bf16.gmra.mxu0 %v600
        %v1367 = vpop.f32.mrf.mxu0
        %v1368 = vadd.f32 %v1319, %v1367
        %v1369 = vpop.f32.mrf.mxu0
        %v1370 = vadd.f32 %v1321, %v1369
        %1371 = vmatmul.bf16.gmra.mxu0 %v604
        %v1372 = vpop.f32.mrf.mxu0
        %v1373 = vadd.f32 %v1324, %v1372
        %v1374 = vpop.f32.mrf.mxu0
        %v1375 = vadd.f32 %v1326, %v1374
        %1376 = vmatmul.bf16.gmra.mxu0 %v608
        %v1377 = vpop.f32.mrf.mxu0
        %v1378 = vadd.f32 %v1329, %v1377
        %v1379 = vpop.f32.mrf.mxu0
        %v1380 = vadd.f32 %v1331, %v1379
        %1381 = vmatmul.bf16.gmra.mxu0 %v612
        %v1382 = vpop.f32.mrf.mxu0
        %v1383 = vadd.f32 %v1334, %v1382
        %v1384 = vpop.f32.mrf.mxu0
        %v1385 = vadd.f32 %v1336, %v1384
        %1386 = vmatmul.bf16.gmra.mxu0 %v616
        %v1387 = vpop.f32.mrf.mxu0
        %v1388 = vadd.f32 %v1339, %v1387
        %v1389 = vpop.f32.mrf.mxu0
        %v1390 = vadd.f32 %v1341, %v1389
        %1391 = vmatmul.bf16.gmra.mxu0 %v620
        %v1392 = vpop.f32.mrf.mxu0
        %v1393 = vadd.f32 %v1344, %v1392
        %v1394 = vpop.f32.mrf.mxu0
        %v1395 = vadd.f32 %v1346, %v1394
        %1396 = vdwg.mxu0
        %v1397 = vmax.f32 %v1162, 0.0
        %v1398 = vmax.f32 %v1164, 0.0
        %v1399 = vmax.f32 %v1167, 0.0
        %v1400 = vmax.f32 %v1169, 0.0
        %v1401 = vmax.f32 %v1172, 0.0
        %v1402 = vmax.f32 %v1174, 0.0
        %v1403 = vmax.f32 %v1177, 0.0
        %v1404 = vmax.f32 %v1179, 0.0
        %v1405 = vmax.f32 %v1182, 0.0
        %v1406 = vmax.f32 %v1184, 0.0
        %v1407 = vmax.f32 %v1187, 0.0
        %v1408 = vmax.f32 %v1189, 0.0
        %v1409 = vmax.f32 %v1192, 0.0
        %v1410 = vmax.f32 %v1194, 0.0
        %v1411 = vmax.f32 %v1197, 0.0
        %v1412 = vmax.f32 %v1199, 0.0
        %v1413 = vxor.u32 %v1358, 2147483648
        %v1414 = vxor.u32 %v1360, 2147483648
        %v1415 = vxor.u32 %v1363, 2147483648
        %v1416 = vxor.u32 %v1365, 2147483648
        %v1417 = vxor.u32 %v1368, 2147483648
        %v1418 = vxor.u32 %v1370, 2147483648
        %v1419 = vxor.u32 %v1373, 2147483648
        %v1420 = vxor.u32 %v1375, 2147483648
        %v1421 = vxor.u32 %v1378, 2147483648
        %v1422 = vxor.u32 %v1380, 2147483648
        %v1423 = vxor.u32 %v1383, 2147483648
        %v1424 = vxor.u32 %v1385, 2147483648
        %v1425 = vxor.u32 %v1388, 2147483648
        %v1426 = vxor.u32 %v1390, 2147483648
        %v1427 = vxor.u32 %v1393, 2147483648
        %v1428 = vxor.u32 %v1395, 2147483648
        %v1429 = vmul.f32 %v1413, 1.442695
        %v1430 = vpow.pop %v1429
        %v1431 = vmul.f32 %v1414, 1.442695
        %v1432 = vpow.pop %v1431
        %v1433 = vmul.f32 %v1415, 1.442695
        %v1434 = vpow.pop %v1433
        %v1435 = vmul.f32 %v1416, 1.442695
        %v1436 = vpow.pop %v1435
        %v1437 = vmul.f32 %v1417, 1.442695
        %v1438 = vpow.pop %v1437
        %v1439 = vmul.f32 %v1418, 1.442695
        %v1440 = vpow.pop %v1439
        %v1441 = vmul.f32 %v1419, 1.442695
        %v1442 = vpow.pop %v1441
        %v1443 = vmul.f32 %v1420, 1.442695
        %v1444 = vpow.pop %v1443
        %v1445 = vmul.f32 %v1421, 1.442695
        %v1446 = vpow.pop %v1445
        %v1447 = vmul.f32 %v1422, 1.442695
        %v1448 = vpow.pop %v1447
        %v1449 = vmul.f32 %v1423, 1.442695
        %v1450 = vpow.pop %v1449
        %v1451 = vmul.f32 %v1424, 1.442695
        %v1452 = vpow.pop %v1451
        %v1453 = vmul.f32 %v1425, 1.442695
        %v1454 = vpow.pop %v1453
        %v1455 = vmul.f32 %v1426, 1.442695
        %v1456 = vpow.pop %v1455
        %v1457 = vmul.f32 %v1427, 1.442695
        %v1458 = vpow.pop %v1457
        %v1459 = vmul.f32 %v1428, 1.442695
        %v1460 = vpow.pop %v1459
        %v1461 = vadd.f32 %v1430, 1.0
        %v1462 = vadd.f32 %v1432, 1.0
        %v1463 = vadd.f32 %v1434, 1.0
        %v1464 = vadd.f32 %v1436, 1.0
        %v1465 = vadd.f32 %v1438, 1.0
        %v1466 = vadd.f32 %v1440, 1.0
        %v1467 = vadd.f32 %v1442, 1.0
        %v1468 = vadd.f32 %v1444, 1.0
        %v1469 = vadd.f32 %v1446, 1.0
        %v1470 = vadd.f32 %v1448, 1.0
        %v1471 = vadd.f32 %v1450, 1.0
        %v1472 = vadd.f32 %v1452, 1.0
        %v1473 = vadd.f32 %v1454, 1.0
        %v1474 = vadd.f32 %v1456, 1.0
        %v1475 = vadd.f32 %v1458, 1.0
        %v1476 = vadd.f32 %v1460, 1.0
        %v1477 = vrcp.pop %v1461
        %v1478 = vmul.f32 %v1461, %v1477
        %v1479 = vsub.f32 1.0, %v1478
        %v1480 = vmul.f32 %v1477, %v1479
        %v1481 = vadd.f32 %v1477, %v1480
        %vm1482 = vweird.f32 %v1461
        %vm1483 = vweird.f32 %v1477
        %vm1484 = vmor %vm1482, %vm1483
        %v1485 = vsel %vm1484, %v1477, %v1481
        %v1486 = vand.u32 2147483647, %v1461
        %vm1487 = vcmp.eq.f32.partialorder %v1486, 8.507059e+37
        %v1488 = vand.u32 %v1461, 2147483648
        %v1489 = vor.u32 1.1754944e-38, %v1488
        %v1490 = vsel %vm1487, %v1489, %v1485
        %v1491 = vmul.f32 1.0, %v1490
        %v1492 = vrcp.pop %v1462
        %v1493 = vmul.f32 %v1462, %v1492
        %v1494 = vsub.f32 1.0, %v1493
        %v1495 = vmul.f32 %v1492, %v1494
        %v1496 = vadd.f32 %v1492, %v1495
        %vm1497 = vweird.f32 %v1462
        %vm1498 = vweird.f32 %v1492
        %vm1499 = vmor %vm1497, %vm1498
        %v1500 = vsel %vm1499, %v1492, %v1496
        %v1501 = vand.u32 2147483647, %v1462
        %vm1502 = vcmp.eq.f32.partialorder %v1501, 8.507059e+37
        %v1503 = vand.u32 %v1462, 2147483648
        %v1504 = vor.u32 1.1754944e-38, %v1503
        %v1505 = vsel %vm1502, %v1504, %v1500
        %v1506 = vmul.f32 1.0, %v1505
        %v1507 = vrcp.pop %v1463
        %v1508 = vmul.f32 %v1463, %v1507
        %v1509 = vsub.f32 1.0, %v1508
        %v1510 = vmul.f32 %v1507, %v1509
        %v1511 = vadd.f32 %v1507, %v1510
        %vm1512 = vweird.f32 %v1463
        %vm1513 = vweird.f32 %v1507
        %vm1514 = vmor %vm1512, %vm1513
        %v1515 = vsel %vm1514, %v1507, %v1511
        %v1516 = vand.u32 2147483647, %v1463
        %vm1517 = vcmp.eq.f32.partialorder %v1516, 8.507059e+37
        %v1518 = vand.u32 %v1463, 2147483648
        %v1519 = vor.u32 1.1754944e-38, %v1518
        %v1520 = vsel %vm1517, %v1519, %v1515
        %v1521 = vmul.f32 1.0, %v1520
        %v1522 = vrcp.pop %v1464
        %v1523 = vmul.f32 %v1464, %v1522
        %v1524 = vsub.f32 1.0, %v1523
        %v1525 = vmul.f32 %v1522, %v1524
        %v1526 = vadd.f32 %v1522, %v1525
        %vm1527 = vweird.f32 %v1464
        %vm1528 = vweird.f32 %v1522
        %vm1529 = vmor %vm1527, %vm1528
        %v1530 = vsel %vm1529, %v1522, %v1526
        %v1531 = vand.u32 2147483647, %v1464
        %vm1532 = vcmp.eq.f32.partialorder %v1531, 8.507059e+37
        %v1533 = vand.u32 %v1464, 2147483648
        %v1534 = vor.u32 1.1754944e-38, %v1533
        %v1535 = vsel %vm1532, %v1534, %v1530
        %v1536 = vmul.f32 1.0, %v1535
        %v1537 = vrcp.pop %v1465
        %v1538 = vmul.f32 %v1465, %v1537
        %v1539 = vsub.f32 1.0, %v1538
        %v1540 = vmul.f32 %v1537, %v1539
        %v1541 = vadd.f32 %v1537, %v1540
        %vm1542 = vweird.f32 %v1465
        %vm1543 = vweird.f32 %v1537
        %vm1544 = vmor %vm1542, %vm1543
        %v1545 = vsel %vm1544, %v1537, %v1541
        %v1546 = vand.u32 2147483647, %v1465
        %vm1547 = vcmp.eq.f32.partialorder %v1546, 8.507059e+37
        %v1548 = vand.u32 %v1465, 2147483648
        %v1549 = vor.u32 1.1754944e-38, %v1548
        %v1550 = vsel %vm1547, %v1549, %v1545
        %v1551 = vmul.f32 1.0, %v1550
        %v1552 = vrcp.pop %v1466
        %v1553 = vmul.f32 %v1466, %v1552
        %v1554 = vsub.f32 1.0, %v1553
        %v1555 = vmul.f32 %v1552, %v1554
        %v1556 = vadd.f32 %v1552, %v1555
        %vm1557 = vweird.f32 %v1466
        %vm1558 = vweird.f32 %v1552
        %vm1559 = vmor %vm1557, %vm1558
        %v1560 = vsel %vm1559, %v1552, %v1556
        %v1561 = vand.u32 2147483647, %v1466
        %vm1562 = vcmp.eq.f32.partialorder %v1561, 8.507059e+37
        %v1563 = vand.u32 %v1466, 2147483648
        %v1564 = vor.u32 1.1754944e-38, %v1563
        %v1565 = vsel %vm1562, %v1564, %v1560
        %v1566 = vmul.f32 1.0, %v1565
        %v1567 = vrcp.pop %v1467
        %v1568 = vmul.f32 %v1467, %v1567
        %v1569 = vsub.f32 1.0, %v1568
        %v1570 = vmul.f32 %v1567, %v1569
        %v1571 = vadd.f32 %v1567, %v1570
        %vm1572 = vweird.f32 %v1467
        %vm1573 = vweird.f32 %v1567
        %vm1574 = vmor %vm1572, %vm1573
        %v1575 = vsel %vm1574, %v1567, %v1571
        %v1576 = vand.u32 2147483647, %v1467
        %vm1577 = vcmp.eq.f32.partialorder %v1576, 8.507059e+37
        %v1578 = vand.u32 %v1467, 2147483648
        %v1579 = vor.u32 1.1754944e-38, %v1578
        %v1580 = vsel %vm1577, %v1579, %v1575
        %v1581 = vmul.f32 1.0, %v1580
        %v1582 = vrcp.pop %v1468
        %v1583 = vmul.f32 %v1468, %v1582
        %v1584 = vsub.f32 1.0, %v1583
        %v1585 = vmul.f32 %v1582, %v1584
        %v1586 = vadd.f32 %v1582, %v1585
        %vm1587 = vweird.f32 %v1468
        %vm1588 = vweird.f32 %v1582
        %vm1589 = vmor %vm1587, %vm1588
        %v1590 = vsel %vm1589, %v1582, %v1586
        %v1591 = vand.u32 2147483647, %v1468
        %vm1592 = vcmp.eq.f32.partialorder %v1591, 8.507059e+37
        %v1593 = vand.u32 %v1468, 2147483648
        %v1594 = vor.u32 1.1754944e-38, %v1593
        %v1595 = vsel %vm1592, %v1594, %v1590
        %v1596 = vmul.f32 1.0, %v1595
        %v1597 = vrcp.pop %v1469
        %v1598 = vmul.f32 %v1469, %v1597
        %v1599 = vsub.f32 1.0, %v1598
        %v1600 = vmul.f32 %v1597, %v1599
        %v1601 = vadd.f32 %v1597, %v1600
        %vm1602 = vweird.f32 %v1469
        %vm1603 = vweird.f32 %v1597
        %vm1604 = vmor %vm1602, %vm1603
        %v1605 = vsel %vm1604, %v1597, %v1601
        %v1606 = vand.u32 2147483647, %v1469
        %vm1607 = vcmp.eq.f32.partialorder %v1606, 8.507059e+37
        %v1608 = vand.u32 %v1469, 2147483648
        %v1609 = vor.u32 1.1754944e-38, %v1608
        %v1610 = vsel %vm1607, %v1609, %v1605
        %v1611 = vmul.f32 1.0, %v1610
        %v1612 = vrcp.pop %v1470
        %v1613 = vmul.f32 %v1470, %v1612
        %v1614 = vsub.f32 1.0, %v1613
        %v1615 = vmul.f32 %v1612, %v1614
        %v1616 = vadd.f32 %v1612, %v1615
        %vm1617 = vweird.f32 %v1470
        %vm1618 = vweird.f32 %v1612
        %vm1619 = vmor %vm1617, %vm1618
        %v1620 = vsel %vm1619, %v1612, %v1616
        %v1621 = vand.u32 2147483647, %v1470
        %vm1622 = vcmp.eq.f32.partialorder %v1621, 8.507059e+37
        %v1623 = vand.u32 %v1470, 2147483648
        %v1624 = vor.u32 1.1754944e-38, %v1623
        %v1625 = vsel %vm1622, %v1624, %v1620
        %v1626 = vmul.f32 1.0, %v1625
        %v1627 = vrcp.pop %v1471
        %v1628 = vmul.f32 %v1471, %v1627
        %v1629 = vsub.f32 1.0, %v1628
        %v1630 = vmul.f32 %v1627, %v1629
        %v1631 = vadd.f32 %v1627, %v1630
        %vm1632 = vweird.f32 %v1471
        %vm1633 = vweird.f32 %v1627
        %vm1634 = vmor %vm1632, %vm1633
        %v1635 = vsel %vm1634, %v1627, %v1631
        %v1636 = vand.u32 2147483647, %v1471
        %vm1637 = vcmp.eq.f32.partialorder %v1636, 8.507059e+37
        %v1638 = vand.u32 %v1471, 2147483648
        %v1639 = vor.u32 1.1754944e-38, %v1638
        %v1640 = vsel %vm1637, %v1639, %v1635
        %v1641 = vmul.f32 1.0, %v1640
        %v1642 = vrcp.pop %v1472
        %v1643 = vmul.f32 %v1472, %v1642
        %v1644 = vsub.f32 1.0, %v1643
        %v1645 = vmul.f32 %v1642, %v1644
        %v1646 = vadd.f32 %v1642, %v1645
        %vm1647 = vweird.f32 %v1472
        %vm1648 = vweird.f32 %v1642
        %vm1649 = vmor %vm1647, %vm1648
        %v1650 = vsel %vm1649, %v1642, %v1646
        %v1651 = vand.u32 2147483647, %v1472
        %vm1652 = vcmp.eq.f32.partialorder %v1651, 8.507059e+37
        %v1653 = vand.u32 %v1472, 2147483648
        %v1654 = vor.u32 1.1754944e-38, %v1653
        %v1655 = vsel %vm1652, %v1654, %v1650
        %v1656 = vmul.f32 1.0, %v1655
        %v1657 = vrcp.pop %v1473
        %v1658 = vmul.f32 %v1473, %v1657
        %v1659 = vsub.f32 1.0, %v1658
        %v1660 = vmul.f32 %v1657, %v1659
        %v1661 = vadd.f32 %v1657, %v1660
        %vm1662 = vweird.f32 %v1473
        %vm1663 = vweird.f32 %v1657
        %vm1664 = vmor %vm1662, %vm1663
        %v1665 = vsel %vm1664, %v1657, %v1661
        %v1666 = vand.u32 2147483647, %v1473
        %vm1667 = vcmp.eq.f32.partialorder %v1666, 8.507059e+37
        %v1668 = vand.u32 %v1473, 2147483648
        %v1669 = vor.u32 1.1754944e-38, %v1668
        %v1670 = vsel %vm1667, %v1669, %v1665
        %v1671 = vmul.f32 1.0, %v1670
        %v1672 = vrcp.pop %v1474
        %v1673 = vmul.f32 %v1474, %v1672
        %v1674 = vsub.f32 1.0, %v1673
        %v1675 = vmul.f32 %v1672, %v1674
        %v1676 = vadd.f32 %v1672, %v1675
        %vm1677 = vweird.f32 %v1474
        %vm1678 = vweird.f32 %v1672
        %vm1679 = vmor %vm1677, %vm1678
        %v1680 = vsel %vm1679, %v1672, %v1676
        %v1681 = vand.u32 2147483647, %v1474
        %vm1682 = vcmp.eq.f32.partialorder %v1681, 8.507059e+37
        %v1683 = vand.u32 %v1474, 2147483648
        %v1684 = vor.u32 1.1754944e-38, %v1683
        %v1685 = vsel %vm1682, %v1684, %v1680
        %v1686 = vmul.f32 1.0, %v1685
        %v1687 = vrcp.pop %v1475
        %v1688 = vmul.f32 %v1475, %v1687
        %v1689 = vsub.f32 1.0, %v1688
        %v1690 = vmul.f32 %v1687, %v1689
        %v1691 = vadd.f32 %v1687, %v1690
        %vm1692 = vweird.f32 %v1475
        %vm1693 = vweird.f32 %v1687
        %vm1694 = vmor %vm1692, %vm1693
        %v1695 = vsel %vm1694, %v1687, %v1691
        %v1696 = vand.u32 2147483647, %v1475
        %vm1697 = vcmp.eq.f32.partialorder %v1696, 8.507059e+37
        %v1698 = vand.u32 %v1475, 2147483648
        %v1699 = vor.u32 1.1754944e-38, %v1698
        %v1700 = vsel %vm1697, %v1699, %v1695
        %v1701 = vmul.f32 1.0, %v1700
        %v1702 = vrcp.pop %v1476
        %v1703 = vmul.f32 %v1476, %v1702
        %v1704 = vsub.f32 1.0, %v1703
        %v1705 = vmul.f32 %v1702, %v1704
        %v1706 = vadd.f32 %v1702, %v1705
        %vm1707 = vweird.f32 %v1476
        %vm1708 = vweird.f32 %v1702
        %vm1709 = vmor %vm1707, %vm1708
        %v1710 = vsel %vm1709, %v1702, %v1706
        %v1711 = vand.u32 2147483647, %v1476
        %vm1712 = vcmp.eq.f32.partialorder %v1711, 8.507059e+37
        %v1713 = vand.u32 %v1476, 2147483648
        %v1714 = vor.u32 1.1754944e-38, %v1713
        %v1715 = vsel %vm1712, %v1714, %v1710
        %v1716 = vmul.f32 1.0, %v1715
        %v1717 = vmul.f32 %v1397, %v1491
        %v1718 = vmul.f32 %v1398, %v1506
        %v1719 = vmul.f32 %v1399, %v1521
        %v1720 = vmul.f32 %v1400, %v1536
        %v1721 = vmul.f32 %v1401, %v1551
        %v1722 = vmul.f32 %v1402, %v1566
        %v1723 = vmul.f32 %v1403, %v1581
        %v1724 = vmul.f32 %v1404, %v1596
        %v1725 = vmul.f32 %v1405, %v1611
        %v1726 = vmul.f32 %v1406, %v1626
        %v1727 = vmul.f32 %v1407, %v1641
        %v1728 = vmul.f32 %v1408, %v1656
        %v1729 = vmul.f32 %v1409, %v1671
        %v1730 = vmul.f32 %v1410, %v1686
        %v1731 = vmul.f32 %v1411, %v1701
        %v1732 = vmul.f32 %v1412, %v1716
        %v1733 = vpack.c.bf16 %v1718, %v1717
        %v1734 = vpack.c.bf16 %v1720, %v1719
        %v1735 = vpack.c.bf16 %v1722, %v1721
        %v1736 = vpack.c.bf16 %v1724, %v1723
        %v1737 = vpack.c.bf16 %v1726, %v1725
        %v1738 = vpack.c.bf16 %v1728, %v1727
        %v1739 = vpack.c.bf16 %v1730, %v1729
        %v1740 = vpack.c.bf16 %v1732, %v1731
        %v1741 = vld [vmem:[%s2] sm:$0x1]
        %1742 = vmatpush.bf16.xpose.msra.mxu0 %v1740
        %1743 = vmatpush.bf16.xpose.msra.mxu0 %v1739
        %1744 = vmatpush.bf16.xpose.msra.mxu0 %v1738
        %1745 = vmatpush.bf16.xpose.msra.mxu0 %v1737
        %1746 = vmatpush.bf16.xpose.msra.mxu0 %v1736
        %1747 = vmatpush.bf16.xpose.msra.mxu0 %v1735
        %1748 = vmatpush.bf16.xpose.msra.mxu0 %v1734
        %1749 = vmatpush.bf16.xpose.msra.mxu0 %v1733
        %1750 = vmatmul.bf16.gmra.mxu0 %v1741
        %v1751 = vpop.f32.mrf.mxu0
        %v1752 = vadd.f32 0.0, %v1751
        %v1753 = vpop.f32.mrf.mxu0
        %1754 = vdwg.mxu0
        %v1755 = vlaneseq
        %v1756 = vand.u32 %v1755, 127
        %v1757 = vadd.s32 %v396, %v1756
        %vm1758 = vcmp.lt.s32.totalorder %v1757, 300
        %v1759 = vsel %vm1758, %v1752, -inf
        %1760 = vst [vmem:[%s328] sm:$0x1] %v1759
        %v1761 = vld [vmem:[#allocation2] sm:$0x1]
        %vm1762 = vcmask 1040384
        %v1763 = vsel %vm1762, %v1759, -inf
        %1764 = vmax.xlane.f32.xlu0 %v1763
        %v1765 = vpop.xlane.xlu0 %1764
        %v1766 = vmax.f32 %v1761, %v1765
        %vm1767 = vcmp.eq.f32.partialorder %v1766, -inf
        %v1768 = vsel %vm1767, 0.0, %v1766
        %v1769 = vsub.f32 %v1761, %v1768
        %v1770 = vmul.f32 %v1769, 1.442695
        %v1771 = vpow.pop %v1770
        %1773 = vset.pattern.permute.xlu0 0
        %1774 = vperm.xlu0 %1773, %v1768
        %v1775 = vpop.permute.xlu0 %1774
        %v1777 = vperm.slane %v1775, 0
        %v1778 = vsub.f32 %v1759, %v1777
        %v1779 = vmul.f32 %v1778, 1.442695
        %v1780 = vpow.pop %v1779
        %v1781 = vld [vmem:[#allocation3] sm:$0x1]
        %v1782 = vmul.f32 %v1771, %v1781
        %v1783 = vsel %vm1762, %v1780, 0.0
        %1784 = vadd.xlane.f32.xlu0 %v1783
        %v1785 = vpop.xlane.xlu0 %1784
        %v1786 = vadd.f32 %v1782, %v1785
        %vm1787 = vcmask 0
        %1788 = vst.msk [vmem:[#allocation3] sm:$0x1] %vm1787, %v1786
        %v1789 = vpack.c.bf16 %v1780, %v1780
        %1790 = vmatpush.bf16.msra.mxu0 %v617
        %1791 = vmatpush.bf16.msra.mxu0 %v613
        %1792 = vmatpush.bf16.msra.mxu0 %v609
        %1793 = vmatpush.bf16.msra.mxu0 %v605
        %1794 = vmatpush.bf16.msra.mxu0 %v601
        %1795 = vmatpush.bf16.msra.mxu0 %v597
        %1796 = vmatpush.bf16.msra.mxu0 %v593
        %1797 = vmatpush.bf16.msra.mxu0 %v589
        %1798 = vmatmul.bf16.gmra.mxu0 %v1789
        %v1799 = vpop.f32.mrf.mxu0
        %v1800 = vadd.f32 0.0, %v1799
        %v1801 = vpop.f32.mrf.mxu0
        %1802 = vdwg.mxu0
        %1803 = vmatpush.bf16.msra.mxu0 %v618
        %1804 = vmatpush.bf16.msra.mxu0 %v614
        %1805 = vmatpush.bf16.msra.mxu0 %v610
        %1806 = vmatpush.bf16.msra.mxu0 %v606
        %1807 = vmatpush.bf16.msra.mxu0 %v602
        %1808 = vmatpush.bf16.msra.mxu0 %v598
        %1809 = vmatpush.bf16.msra.mxu0 %v594
        %1810 = vmatpush.bf16.msra.mxu0 %v590
        %1811 = vmatmul.bf16.gmra.mxu0 %v1789
        %v1812 = vpop.f32.mrf.mxu0
        %v1813 = vadd.f32 0.0, %v1812
        %v1814 = vpop.f32.mrf.mxu0
        %1815 = vdwg.mxu0
        %1816 = vmatpush.bf16.msra.mxu0 %v619
        %1817 = vmatpush.bf16.msra.mxu0 %v615
        %1818 = vmatpush.bf16.msra.mxu0 %v611
        %1819 = vmatpush.bf16.msra.mxu0 %v607
        %1820 = vmatpush.bf16.msra.mxu0 %v603
        %1821 = vmatpush.bf16.msra.mxu0 %v599
        %1822 = vmatpush.bf16.msra.mxu0 %v595
        %1823 = vmatpush.bf16.msra.mxu0 %v591
        %1824 = vmatmul.bf16.gmra.mxu0 %v1789
        %v1825 = vpop.f32.mrf.mxu0
        %v1826 = vadd.f32 0.0, %v1825
        %v1827 = vpop.f32.mrf.mxu0
        %1828 = vdwg.mxu0
        %1829 = vmatpush.bf16.msra.mxu0 %v620
        %1830 = vmatpush.bf16.msra.mxu0 %v616
        %1831 = vmatpush.bf16.msra.mxu0 %v612
        %1832 = vmatpush.bf16.msra.mxu0 %v608
        %1833 = vmatpush.bf16.msra.mxu0 %v604
        %1834 = vmatpush.bf16.msra.mxu0 %v600
        %1835 = vmatpush.bf16.msra.mxu0 %v596
        %1836 = vmatpush.bf16.msra.mxu0 %v592
        %1837 = vmatmul.bf16.gmra.mxu0 %v1789
        %v1838 = vpop.f32.mrf.mxu0
        %v1839 = vadd.f32 0.0, %v1838
        %v1840 = vpop.f32.mrf.mxu0
        %1841 = vdwg.mxu0
        %v1842 = vld [vmem:[#allocation4] sm:$0xf]
        %1844 = vset.pattern.permute.xlu0 0
        %1845 = vperm.xlu0 %1844, %v1771
        %v1846 = vpop.permute.xlu0 %1845
        %v1848 = vperm.slane %v1846, 0
        %v1849 = vmul.f32 %v1848, %v1842
        %v1854 = vrot.slane %v1813, 7
        %v1855 = vrot.slane %v1826, 6
        %v1856 = vrot.slane %v1839, 5
        %v1857 = vsel %vm1762, %v1800, %v1854
        %vm1858 = vcmask 1042434
        %v1859 = vsel %vm1858, %v1855, %v1856
        %vm1860 = vcmask 1041408
        %v1861 = vsel %vm1860, %v1857, %v1859
        %v1863 = vadd.f32 %v1849, %v1861
        %v1864 = vlaneseq
        %vm1865 = vcmp.ge.s32.totalorder %v1864, 0
        %vm1866 = vcmp.lt.s32.totalorder %v1864, 512
        %vm1867 = vmand %vm1865, %vm1866
        %1868 = vst.msk [vmem:[#allocation4] sm:$0xf] %vm1867, %v1863
        %1869 = vst.msk [vmem:[#allocation2] sm:$0x1] %vm1787, %v1766
        %p1870 = scmp.eq.s32.totalorder %s33, 1
        // Predicated region
        $region45: #{tpu_custom_call.1} parent=31 // pred_check
          %p1871 = pneg %p1870
        $region46: #{tpu_custom_call.1} parent=31 // pred_check_branch
          %1873 = sbr.rel (%p1871) target = $region48
        $region47: #{tpu_custom_call.1} parent=31 // pred_region
          %v1874 = vld [vmem:[#allocation2] sm:$0x1]
          %1875 = vst.msk [vmem:[%s360] sm:$0x1] %vm1787, %v1874
          %v1876 = vld [vmem:[#allocation3] sm:$0x1]
          %1877 = vst.msk [vmem:[%s363] sm:$0x1] %vm1787, %v1876
          %v1878 = vld [vmem:[#allocation4] sm:$0xf]
          %1879 = vst.msk [vmem:[%s345] sm:$0xf] %vm1867, %v1878
        $region48: #{tpu_custom_call.1} parent=31 // pred_fallthru
          _
        %s1880 = sand.u32 %s128, 1
        %s1881 = scalar_lea.sflag [#allocation7], %s1880
        %s1882 = sand.u32 %s128, 1
        %s1883 = scalar_lea.vmem [#allocation10], %s1882
        %p1884 = scmp.lt.s32.totalorder %s32, 1
        %s1885 = scalar_select %p1884, %s32, 1
        %s1886 = scalar_lea.vmem %s4, %s1885
        %p1887 = scmp.lt.s32.totalorder %s32, 1
        %s1888 = scalar_select %p1887, %s32, 1
        %s1889 = scalar_lea.vmem %s5, %s1888
        %s1890 = sand.u32 %s206, 1
        %s1891 = scalar_lea.sflag [#allocation12], %s1890
        %s1892 = sand.u32 %s206, 1
        %s1893 = smul.addr %s1892, 4
        %s1894 = scalar_lea.vmem [#allocation11], %s1893
        // Predicated region
        $region49: #{tpu_custom_call.1} parent=31 // pred_check
          %p1895 = pneg %p138
        $region50: #{tpu_custom_call.1} parent=31 // pred_check_branch
          %1897 = sbr.rel (%p1895) target = $region52
        $region51: #{tpu_custom_call.1} parent=31 // pred_region
          %s1898 = smul.u32 %s32, 2
          %s1899 = sadd.s32 %s1898, %s33
          %1901 = vsyncadd %s1881, 0
          %s1902 = scalar_lea.hbm %s3, %s1899
          %s1904 = sshll.u32 %s1883, 4
          %s1905 = int_to_ptr.vmem [resolvable:$true] %s1904
          %s1906 = sshll.u32 %s1902, 4
          %s1907 = int_to_ptr.hbm [resolvable:$true] %s1906
          %1909 = dma.vmem_to_hbm [thread:$0]  %s1905, 16, %s1907, %s1881
        $region52: #{tpu_custom_call.1} parent=31 // pred_fallthru
          _
        // Predicated region
        $region53: #{tpu_custom_call.1} parent=31 // pred_check
          %p1910 = pneg %p164
        $region54: #{tpu_custom_call.1} parent=31 // pred_check_branch
          %1912 = sbr.rel (%p1910) target = $region56
        $region55: #{tpu_custom_call.1} parent=31 // pred_region
          _
        $region56: #{tpu_custom_call.1} parent=31 // pred_fallthru
          _
        // Predicated region
        $region57: #{tpu_custom_call.1} parent=31 // pred_check
          %p1913 = pneg %p190
        $region58: #{tpu_custom_call.1} parent=31 // pred_check_branch
          %1915 = sbr.rel (%p1913) target = $region60
        $region59: #{tpu_custom_call.1} parent=31 // pred_region
          _
        $region60: #{tpu_custom_call.1} parent=31 // pred_fallthru
          _
        // Predicated region
        $region61: #{tpu_custom_call.1} parent=31 // pred_check
          %p1916 = pneg %p216
        $region62: #{tpu_custom_call.1} parent=31 // pred_check_branch
          %1918 = sbr.rel (%p1916) target = $region64
        $region63: #{tpu_custom_call.1} parent=31 // pred_region
          %1920 = vsyncadd %s1891, 0
          %s1921 = smul.addr %s32, 4
          %s1922 = scalar_lea.hbm %s6, %s1921
          %s1924 = sshll.u32 %s1894, 4
          %s1925 = int_to_ptr.vmem [resolvable:$true] %s1924
          %s1926 = sshll.u32 %s1922, 4
          %s1927 = int_to_ptr.hbm [resolvable:$true] %s1926
          %1929 = dma.vmem_to_hbm [thread:$0]  %s1925, 64, %s1927, %s1891
        $region64: #{tpu_custom_call.1} parent=31 // pred_fallthru
          _
      $region32: #{tpu_custom_call.1} parent=5 // pred_fallthru
        _
      %p1930 = scmp.le.s32.totalorder 2, %s23
      // Predicated region
      $region65: #{tpu_custom_call.1} parent=5 // pred_check
        %p1931 = pneg %p1930
      $region66: #{tpu_custom_call.1} parent=5 // pred_check_branch
        %1933 = sbr.rel (%p1931) target = $region68
      $region67: #{tpu_custom_call.1} parent=5 // pred_region
        %s1934 = ssub.s32 %s23, 2
        // Predicated region
        $region69: #{tpu_custom_call.1} parent=67 // pred_check
          %p1935 = pneg %p144
        $region70: #{tpu_custom_call.1} parent=67 // pred_check_branch
          %1937 = sbr.rel (%p1935) target = $region72
        $region71: #{tpu_custom_call.1} parent=67 // pred_region
          %s1938 = sand.u32 %s129, 1
          %s1939 = scalar_lea.sflag [#allocation7], %s1938
          %s1940 = sand.u32 %s129, 1
          %s1941 = scalar_lea.vmem [#allocation10], %s1940
          %1943 = dma.done %s1939, 16
        $region72: #{tpu_custom_call.1} parent=67 // pred_fallthru
          _
        // Predicated region
        $region73: #{tpu_custom_call.1} parent=67 // pred_check
          %p1944 = pneg %p170
        $region74: #{tpu_custom_call.1} parent=67 // pred_check_branch
          %1946 = sbr.rel (%p1944) target = $region76
        $region75: #{tpu_custom_call.1} parent=67 // pred_region
          %p1947 = scmp.lt.s32.totalorder %s34, 1
          %s1948 = scalar_select %p1947, %s34, 1
          %s1949 = scalar_lea.vmem %s4, %s1948
        $region76: #{tpu_custom_call.1} parent=67 // pred_fallthru
          _
        // Predicated region
        $region77: #{tpu_custom_call.1} parent=67 // pred_check
          %p1950 = pneg %p196
        $region78: #{tpu_custom_call.1} parent=67 // pred_check_branch
          %1952 = sbr.rel (%p1950) target = $region80
        $region79: #{tpu_custom_call.1} parent=67 // pred_region
          %p1953 = scmp.lt.s32.totalorder %s34, 1
          %s1954 = scalar_select %p1953, %s34, 1
          %s1955 = scalar_lea.vmem %s5, %s1954
        $region80: #{tpu_custom_call.1} parent=67 // pred_fallthru
          _
        // Predicated region
        $region81: #{tpu_custom_call.1} parent=67 // pred_check
          %p1956 = pneg %p222
        $region82: #{tpu_custom_call.1} parent=67 // pred_check_branch
          %1958 = sbr.rel (%p1956) target = $region84
        $region83: #{tpu_custom_call.1} parent=67 // pred_region
          %s1959 = sand.u32 %s207, 1
          %s1960 = scalar_lea.sflag [#allocation12], %s1959
          %s1961 = sand.u32 %s207, 1
          %s1962 = smul.addr %s1961, 4
          %s1963 = scalar_lea.vmem [#allocation11], %s1962
          %1965 = dma.done %s1960, 64
        $region84: #{tpu_custom_call.1} parent=67 // pred_fallthru
          _
      $region68: #{tpu_custom_call.1} parent=5 // pred_fallthru
        _
    $region6: #{tpu_custom_call.1} parent=1 // loop_footer
      %s27 = sadd.s32 1, %s23
    $region7: #{tpu_custom_call.1} parent=1 // loop_footer_branch
      %22 = sbr.rel target = $region3
    $region8: #{tpu_custom_call.1} parent=1 // loop_exit
      _
    %1966 = vsyncpa [#allocation6], 1
    %s1967 = scalar_lea.sflag [#allocation6], 1
    %1968 = vsyncpa %s1967, 1
    %1969 = vsyncpa [#allocation9], 1
    %1970 = vsyncpa [#allocation7], 1
    %s1971 = scalar_lea.sflag [#allocation7], 1
    %1972 = vsyncpa %s1971, 1
    %1973 = vsyncpa [#allocation12], 1
    %s1974 = scalar_lea.sflag [#allocation12], 1
    %1975 = vsyncpa %s1974, 1

</llo_original>
